<compile_context>
chip_gen: v6e
topology: v6e:2x2x1
jax: 0.10.0
libtpu: 0.0.40
codegen_flags: <defaults>
</compile_context>

<pallas_src>
import jax
import jax.numpy as jnp
from jax import lax
from jax.experimental import pallas as pl
from jax.experimental.pallas import tpu as pltpu

# cfg stand-in (consistent with the module's arithmetic):
#   cfg.latent_dim = 8, cfg.img_size = 64 -> features (B, 8, 2, 2), repr (B, 8)
LATENT_DIM = 8
IMG_SIZE = 64
SPATIAL = IMG_SIZE // 32                                              # 2
D_IN = LATENT_DIM * IMG_SIZE // 32 * IMG_SIZE // 32 + LATENT_DIM      # 40
H1, H2, H3, H4 = 1024, 512, 256, 1
LEAKY_SLOPE = 0.01                                                    # nn.LeakyReLU default

SMALL_BATCH_MAX = 1024   # up to this, run a single full-array batch block
TILE_M_LARGE = 512       # batch rows per grid step in the large-batch regime


def _leaky_relu(x):
    return jnp.where(x > 0, x, LEAKY_SLOPE * x)


def global_mi_kernel(x_ref,
                     w1_ref, b1_ref,
                     w2_ref, b2_ref,
                     w3_ref, b3_ref,
                     w4_ref, b4_ref,
                     o_ref):
    """One batch tile of the MLP.

    bf16 matmuls with f32 accumulation; bias add / LeakyReLU / sigmoid in f32;
    only bf16 intermediates are materialized between layers.
    """
    x = x_ref[...]                                                    # (tile_m, D_IN) bf16

    h = jnp.dot(x, w1_ref[...], preferred_element_type=jnp.float32) + b1_ref[...]
    h = _leaky_relu(h).astype(jnp.bfloat16)                           # (tile_m, 1024) bf16

    h = jnp.dot(h, w2_ref[...], preferred_element_type=jnp.float32) + b2_ref[...]
    h = _leaky_relu(h).astype(jnp.bfloat16)                           # (tile_m, 512) bf16

    h = jnp.dot(h, w3_ref[...], preferred_element_type=jnp.float32) + b3_ref[...]
    h = _leaky_relu(h).astype(jnp.bfloat16)                           # (tile_m, 256) bf16

    # Final 256 -> 1 layer: contract the single weight row (1, 256) against h's
    # feature axis (attention-scores style dimension numbers).  Result is
    # lane-dense (1, tile_m) -> unmasked full-lane stores for tile_m >= 128.
    logits = lax.dot_general(
        w4_ref[...], h,
        dimension_numbers=(((1,), (1,)), ((), ())),
        preferred_element_type=jnp.float32) + b4_ref[...]             # (1, tile_m) f32

    o_ref[...] = jax.nn.sigmoid(logits)


def _choose_tiling(B):
    """Adaptive tile: single padded block for small/medium B, 512-row tiles for big B."""
    if B <= SMALL_BATCH_MAX:
        tile_m = max(8, ((B + 7) // 8) * 8)       # pad only to the sublane multiple
        return tile_m, tile_m                     # one block == whole (padded) batch
    tile_m = TILE_M_LARGE
    b_padded = ((B + tile_m - 1) // tile_m) * tile_m
    return tile_m, b_padded


def global_mi_forward(features, representation, params):
    """features: (B, C, W, H) f32, representation: (B, C) f32 -> (B,) f32."""
    B = features.shape[0]
    x = jnp.concatenate([features.reshape(B, -1), representation], axis=1)  # (B, D_IN)
    x = x.astype(jnp.bfloat16)          # halves activation DMA; matmuls are bf16 anyway
    d_in = x.shape[1]

    tile_m, b_padded = _choose_tiling(B)
    if b_padded != B:
        x = jnp.pad(x, ((0, b_padded - B), (0, 0)))
    num_tiles = b_padded // tile_m

    (w1, b1), (w2, b2), (w3, b3), (w4, b4) = params

    # Constant blocks (whole weight / bias, constant index_map): loaded once,
    # VMEM-resident across batch tiles, single-buffered (they never change).
    resident = lambda a: pl.BlockSpec(a.shape, lambda i: (0, 0),
                                      pipeline_mode=pl.Buffered(1))

    # Only ask for megacore sharding when there are enough tiles that each
    # core's private weight DMA amortizes (matters on v7x's 2 TCs).
    semantics = ("parallel",) if num_tiles >= 4 else ("arbitrary",)

    out = pl.pallas_call(
        global_mi_kernel,
        out_shape=jax.ShapeDtypeStruct((1, b_padded), jnp.float32),   # lane-dense output
        grid=(num_tiles,),
        in_specs=[
            pl.BlockSpec((tile_m, d_in), lambda i: (i, 0)),           # activations stream
            resident(w1), resident(b1),
            resident(w2), resident(b2),
            resident(w3), resident(b3),
            resident(w4), resident(b4),
        ],
        out_specs=pl.BlockSpec((1, tile_m), lambda i: (0, i)),
        compiler_params=pltpu.CompilerParams(
            dimension_semantics=semantics,
            vmem_limit_bytes=32 << 20),            # ceiling; footprint < 8 MiB
    )(x, w1, b1, w2, b2, w3, b3, w4, b4)

    return out[0, :B]   # matches .squeeze(dim=1)


def init_params(key):
    """Deterministic init matching nn.Linear default (uniform +/- 1/sqrt(fan_in)).

    w1..w3 stored (in_features, out_features); w4 stored as a row (1, 256)
    (PyTorch's (out, in) layout for the last layer).  Weights cast to bf16,
    biases kept f32 and 2-D for clean lane broadcasting.
    """
    def linear(k, fan_in, shape_w, shape_b):
        kw, kb = jax.random.split(k)
        bound = 1.0 / (fan_in ** 0.5)
        w = jax.random.uniform(kw, shape_w, jnp.float32, -bound, bound)
        b = jax.random.uniform(kb, shape_b, jnp.float32, -bound, bound)
        return w, b

    k1, k2, k3, k4 = jax.random.split(key, 4)
    w1, b1 = linear(k1, D_IN, (D_IN, H1), (1, H1))
    w2, b2 = linear(k2, H1, (H1, H2), (1, H2))
    w3, b3 = linear(k3, H2, (H2, H3), (1, H3))
    w4, b4 = linear(k4, H3, (H4, H3), (1, H4))            # (1, 256), (1, 1)

    return ((w1.astype(jnp.bfloat16), b1),
            (w2.astype(jnp.bfloat16), b2),
            (w3.astype(jnp.bfloat16), b3),
            (w4.astype(jnp.bfloat16), b4))


def reference_forward(features, representation, params):
    """Pure-JAX reference using the same bf16-rounded weights/inputs, all-f32 math."""
    B = features.shape[0]
    x = jnp.concatenate([features.reshape(B, -1), representation], axis=1)
    x = x.astype(jnp.bfloat16).astype(jnp.float32)        # same rounding as the kernel path
    (w1, b1), (w2, b2), (w3, b3), (w4, b4) = params
    h = x
    for w, b in ((w1, b1), (w2, b2), (w3, b3)):
        h = jnp.dot(h, w.astype(jnp.float32)) + b
        h = jnp.where(h > 0, h, LEAKY_SLOPE * h)
        h = h.astype(jnp.bfloat16).astype(jnp.float32)    # kernel materializes bf16
    logits = jnp.dot(h, w4.astype(jnp.float32).T) + b4    # (B, 1)
    return jax.nn.sigmoid(logits)[:, 0]


if __name__ == "__main__":
    key = jax.random.PRNGKey(0)
    k_feat, k_rep, k_par = jax.random.split(key, 3)

    B = 2
    features = jax.random.normal(
        k_feat, (B, LATENT_DIM, SPATIAL, SPATIAL), jnp.float32)   # (2, 8, 2, 2)
    representation = jax.random.normal(
        k_rep, (B, LATENT_DIM), jnp.float32)                      # (2, 8)

    params = init_params(k_par)

    out = global_mi_forward(features, representation, params)
    out = jax.block_until_ready(out)

    ref = reference_forward(features, representation, params)
    assert out.shape == (B,)
    assert bool(jnp.all(jnp.isfinite(out)))
    assert bool(jnp.allclose(out, ref, atol=5e-2)), (out, ref)
    print("KERNEL_OK")
</pallas_src>

<mosaic_0001>
module attributes {stable_mosaic.version = 11 : i64} {
  func.func @global_mi_kernel(%arg0: i32, %arg1: memref<8x40xbf16, #tpu.memory_space<vmem>>, %arg2: memref<40x1024xbf16, #tpu.memory_space<vmem>>, %arg3: memref<1x1024xf32, #tpu.memory_space<vmem>>, %arg4: memref<1024x512xbf16, #tpu.memory_space<vmem>>, %arg5: memref<1x512xf32, #tpu.memory_space<vmem>>, %arg6: memref<512x256xbf16, #tpu.memory_space<vmem>>, %arg7: memref<1x256xf32, #tpu.memory_space<vmem>>, %arg8: memref<1x256xbf16, #tpu.memory_space<vmem>>, %arg9: memref<1x1xf32, #tpu.memory_space<vmem>>, %arg10: memref<1x8xf32, #tpu.memory_space<vmem>>) attributes {dimension_semantics = [#tpu.dimension_semantics<arbitrary>], iteration_bounds = array<i64: 1>, scalar_prefetch = 0 : i64, scratch_operands = 0 : i64, tpu.core_type = #tpu.core_type<tc>, window_params = [{transform_indices = @transform_0, window_bounds = array<i64: 8, 40>}, {pipeline_mode = #tpu.pipeline_mode<synchronous>, transform_indices = @transform_1, window_bounds = array<i64: 40, 1024>}, {pipeline_mode = #tpu.pipeline_mode<synchronous>, transform_indices = @transform_2, window_bounds = array<i64: 1, 1024>}, {pipeline_mode = #tpu.pipeline_mode<synchronous>, transform_indices = @transform_3, window_bounds = array<i64: 1024, 512>}, {pipeline_mode = #tpu.pipeline_mode<synchronous>, transform_indices = @transform_4, window_bounds = array<i64: 1, 512>}, {pipeline_mode = #tpu.pipeline_mode<synchronous>, transform_indices = @transform_5, window_bounds = array<i64: 512, 256>}, {pipeline_mode = #tpu.pipeline_mode<synchronous>, transform_indices = @transform_6, window_bounds = array<i64: 1, 256>}, {pipeline_mode = #tpu.pipeline_mode<synchronous>, transform_indices = @transform_7, window_bounds = array<i64: 1, 256>}, {pipeline_mode = #tpu.pipeline_mode<synchronous>, transform_indices = @transform_8, window_bounds = array<i64: 1, 1>}, {transform_indices = @transform_9, window_bounds = array<i64: 1, 8>}]} {
    %c0 = arith.constant 0 : index
    %c0_0 = arith.constant 0 : index
    %0 = vector.load %arg1[%c0, %c0_0] : memref<8x40xbf16, #tpu.memory_space<vmem>>, vector<8x40xbf16>
    %c0_1 = arith.constant 0 : index
    %c0_2 = arith.constant 0 : index
    %1 = vector.load %arg2[%c0_1, %c0_2] : memref<40x1024xbf16, #tpu.memory_space<vmem>>, vector<40x1024xbf16>
    %cst = arith.constant dense<0.000000e+00> : vector<8x1024xf32>
    %2 = tpu.matmul %0, %1, %cst {dimension_numbers = #tpu.dot_dimension_numbers<[1], [0], [0], [1], [0, 0, 1, 1], [], []>} : vector<8x40xbf16>, vector<40x1024xbf16>, vector<8x1024xf32> -> vector<8x1024xf32>
    %c0_3 = arith.constant 0 : index
    %c0_4 = arith.constant 0 : index
    %3 = vector.load %arg3[%c0_3, %c0_4] : memref<1x1024xf32, #tpu.memory_space<vmem>>, vector<1x1024xf32>
    %4 = vector.broadcast %3 : vector<1x1024xf32> to vector<8x1024xf32>
    %5 = arith.addf %2, %4 : vector<8x1024xf32>
    %cst_5 = arith.constant 0.000000e+00 : f32
    %6 = vector.broadcast %cst_5 : f32 to vector<8x1024xf32>
    %7 = arith.cmpf ogt, %5, %6 : vector<8x1024xf32>
    %cst_6 = arith.constant 0.00999999977 : f32
    %8 = vector.broadcast %cst_6 : f32 to vector<8x1024xf32>
    %9 = arith.mulf %8, %5 : vector<8x1024xf32>
    %10 = arith.select %7, %5, %9 : vector<8x1024xi1>, vector<8x1024xf32>
    %11 = arith.truncf %10 : vector<8x1024xf32> to vector<8x1024xbf16>
    %c0_7 = arith.constant 0 : index
    %c0_8 = arith.constant 0 : index
    %12 = vector.load %arg4[%c0_7, %c0_8] : memref<1024x512xbf16, #tpu.memory_space<vmem>>, vector<1024x512xbf16>
    %cst_9 = arith.constant dense<0.000000e+00> : vector<8x512xf32>
    %13 = tpu.matmul %11, %12, %cst_9 {dimension_numbers = #tpu.dot_dimension_numbers<[1], [0], [0], [1], [0, 0, 1, 1], [], []>} : vector<8x1024xbf16>, vector<1024x512xbf16>, vector<8x512xf32> -> vector<8x512xf32>
    %c0_10 = arith.constant 0 : index
    %c0_11 = arith.constant 0 : index
    %14 = vector.load %arg5[%c0_10, %c0_11] : memref<1x512xf32, #tpu.memory_space<vmem>>, vector<1x512xf32>
    %15 = vector.broadcast %14 : vector<1x512xf32> to vector<8x512xf32>
    %16 = arith.addf %13, %15 : vector<8x512xf32>
    %cst_12 = arith.constant 0.000000e+00 : f32
    %17 = vector.broadcast %cst_12 : f32 to vector<8x512xf32>
    %18 = arith.cmpf ogt, %16, %17 : vector<8x512xf32>
    %cst_13 = arith.constant 0.00999999977 : f32
    %19 = vector.broadcast %cst_13 : f32 to vector<8x512xf32>
    %20 = arith.mulf %19, %16 : vector<8x512xf32>
    %21 = arith.select %18, %16, %20 : vector<8x512xi1>, vector<8x512xf32>
    %22 = arith.truncf %21 : vector<8x512xf32> to vector<8x512xbf16>
    %c0_14 = arith.constant 0 : index
    %c0_15 = arith.constant 0 : index
    %23 = vector.load %arg6[%c0_14, %c0_15] : memref<512x256xbf16, #tpu.memory_space<vmem>>, vector<512x256xbf16>
    %cst_16 = arith.constant dense<0.000000e+00> : vector<8x256xf32>
    %24 = tpu.matmul %22, %23, %cst_16 {dimension_numbers = #tpu.dot_dimension_numbers<[1], [0], [0], [1], [0, 0, 1, 1], [], []>} : vector<8x512xbf16>, vector<512x256xbf16>, vector<8x256xf32> -> vector<8x256xf32>
    %c0_17 = arith.constant 0 : index
    %c0_18 = arith.constant 0 : index
    %25 = vector.load %arg7[%c0_17, %c0_18] : memref<1x256xf32, #tpu.memory_space<vmem>>, vector<1x256xf32>
    %26 = vector.broadcast %25 : vector<1x256xf32> to vector<8x256xf32>
    %27 = arith.addf %24, %26 : vector<8x256xf32>
    %cst_19 = arith.constant 0.000000e+00 : f32
    %28 = vector.broadcast %cst_19 : f32 to vector<8x256xf32>
    %29 = arith.cmpf ogt, %27, %28 : vector<8x256xf32>
    %cst_20 = arith.constant 0.00999999977 : f32
    %30 = vector.broadcast %cst_20 : f32 to vector<8x256xf32>
    %31 = arith.mulf %30, %27 : vector<8x256xf32>
    %32 = arith.select %29, %27, %31 : vector<8x256xi1>, vector<8x256xf32>
    %33 = arith.truncf %32 : vector<8x256xf32> to vector<8x256xbf16>
    %c0_21 = arith.constant 0 : index
    %c0_22 = arith.constant 0 : index
    %34 = vector.load %arg8[%c0_21, %c0_22] : memref<1x256xbf16, #tpu.memory_space<vmem>>, vector<1x256xbf16>
    %cst_23 = arith.constant dense<0.000000e+00> : vector<1x8xf32>
    %35 = tpu.matmul %34, %33, %cst_23 {dimension_numbers = #tpu.dot_dimension_numbers<[1], [1], [0], [0], [0, 0, 1, 0], [], []>} : vector<1x256xbf16>, vector<8x256xbf16>, vector<1x8xf32> -> vector<1x8xf32>
    %c0_24 = arith.constant 0 : index
    %c0_25 = arith.constant 0 : index
    %36 = vector.load %arg9[%c0_24, %c0_25] : memref<1x1xf32, #tpu.memory_space<vmem>>, vector<1x1xf32>
    %37 = vector.broadcast %36 : vector<1x1xf32> to vector<1x8xf32>
    %38 = arith.addf %35, %37 : vector<1x8xf32>
    %39 = arith.negf %38 : vector<1x8xf32>
    %40 = math.exp %39 : vector<1x8xf32>
    %cst_26 = arith.constant 1.000000e+00 : f32
    %41 = vector.broadcast %cst_26 : f32 to vector<1x8xf32>
    %42 = arith.addf %41, %40 : vector<1x8xf32>
    %43 = arith.divf %41, %42 : vector<1x8xf32>
    %c0_27 = arith.constant 0 : index
    %c0_28 = arith.constant 0 : index
    %44 = vector.load %arg10[%c0_27, %c0_28] : memref<1x8xf32, #tpu.memory_space<vmem>>, vector<1x8xf32>
    tpu.vector_store %arg10[%c0_27, %c0_28], %43 {strides = array<i32>} : memref<1x8xf32, #tpu.memory_space<vmem>>, vector<1x8xf32>,
    return
  }
  func.func @transform_0(%arg0: i32) -> (i32, i32) {
    %c0_i32 = arith.constant 0 : i32
    %c0_i32_0 = arith.constant 0 : i32
    return %arg0, %c0_i32 : i32, i32
  }
  func.func @transform_1(%arg0: i32) -> (i32, i32) {
    %c0_i32 = arith.constant 0 : i32
    %c0_i32_0 = arith.constant 0 : i32
    %c0_i32_1 = arith.constant 0 : i32
    return %c0_i32, %c0_i32_0 : i32, i32
  }
  func.func @transform_2(%arg0: i32) -> (i32, i32) {
    %c0_i32 = arith.constant 0 : i32
    %c0_i32_0 = arith.constant 0 : i32
    %c0_i32_1 = arith.constant 0 : i32
    return %c0_i32, %c0_i32_0 : i32, i32
  }
  func.func @transform_3(%arg0: i32) -> (i32, i32) {
    %c0_i32 = arith.constant 0 : i32
    %c0_i32_0 = arith.constant 0 : i32
    %c0_i32_1 = arith.constant 0 : i32
    return %c0_i32, %c0_i32_0 : i32, i32
  }
  func.func @transform_4(%arg0: i32) -> (i32, i32) {
    %c0_i32 = arith.constant 0 : i32
    %c0_i32_0 = arith.constant 0 : i32
    %c0_i32_1 = arith.constant 0 : i32
    return %c0_i32, %c0_i32_0 : i32, i32
  }
  func.func @transform_5(%arg0: i32) -> (i32, i32) {
    %c0_i32 = arith.constant 0 : i32
    %c0_i32_0 = arith.constant 0 : i32
    %c0_i32_1 = arith.constant 0 : i32
    return %c0_i32, %c0_i32_0 : i32, i32
  }
  func.func @transform_6(%arg0: i32) -> (i32, i32) {
    %c0_i32 = arith.constant 0 : i32
    %c0_i32_0 = arith.constant 0 : i32
    %c0_i32_1 = arith.constant 0 : i32
    return %c0_i32, %c0_i32_0 : i32, i32
  }
  func.func @transform_7(%arg0: i32) -> (i32, i32) {
    %c0_i32 = arith.constant 0 : i32
    %c0_i32_0 = arith.constant 0 : i32
    %c0_i32_1 = arith.constant 0 : i32
    return %c0_i32, %c0_i32_0 : i32, i32
  }
  func.func @transform_8(%arg0: i32) -> (i32, i32) {
    %c0_i32 = arith.constant 0 : i32
    %c0_i32_0 = arith.constant 0 : i32
    %c0_i32_1 = arith.constant 0 : i32
    return %c0_i32, %c0_i32_0 : i32, i32
  }
  func.func @transform_9(%arg0: i32) -> (i32, i32) {
    %c0_i32 = arith.constant 0 : i32
    %c0_i32_0 = arith.constant 0 : i32
    return %c0_i32, %arg0 : i32, i32
  }
}

</mosaic_0001>

<llo_original>
// kernel: tpu_custom_call.1
$region0: #{tpu_custom_call.1}
  #allocation0 [shape = 'u32[]', space=smem, size = 0x4, offset = 0x4, fixed_abs, tag = 'smem constant byte address 0x4 - core index']
  #allocation1 [shape = 'u32[144,128]{1,0:T(1,128)}', space=vmem, size = 0x12000, scoped, tag = 'internal scratch']
  #allocation2 [shape = 'f32[1,1]{1,0:T(1,128)S(1)}', space=vmem, size = 0x200, scoped, tag = 'scoped memory for tpu_custom_call.1']
  %s0 = inlined_call_operand.hbm [shape: bf16[8,40], index: 0, kind: input, shape index: {}]
  %s1 = inlined_call_operand.hbm [shape: bf16[40,1024], index: 1, kind: input, shape index: {}]
  %s2 = inlined_call_operand.hbm [shape: f32[1,1024], index: 2, kind: input, shape index: {}]
  %s3 = inlined_call_operand.hbm [shape: bf16[1024,512], index: 3, kind: input, shape index: {}]
  %s4 = inlined_call_operand.vmem [shape: f32[1,512], index: 4, kind: input, shape index: {}]
  %s5 = inlined_call_operand.hbm [shape: bf16[512,256], index: 5, kind: input, shape index: {}]
  %s6 = inlined_call_operand.vmem [shape: f32[1,256], index: 6, kind: input, shape index: {}]
  %s7 = inlined_call_operand.vmem [shape: bf16[1,256], index: 7, kind: input, shape index: {}]
  %s8 = inlined_call_operand.<no memory space> [shape: f32[1,1], index: 8, kind: input, shape index: {}]
  %s9 = inlined_call_operand.hbm [shape: f32[1,8], index: 9, kind: output, shape index: {}]
  %s10 = sld [smem:[#allocation0]]
  $region66: #{tpu_custom_call.1} parent=0
    _
  %s12 = ssub.s32 1, %s10
  %s13 = scalar_select 0, %s12, %s10
  %v14 = vstv %s8
  %15 = vst [vmem:[#allocation2] sm:$0x1] %v14
  $region1: #{tpu_custom_call.1} parent=0
    #allocation3 [shape = 'u8[2048]{0}', space=vmem, size = 0x800, scoped, tag = 'input window, operand 0, single buffered']
    #allocation4 [shape = 's32[1]{0}', space=sflag, size = 0x4, scoped, tag = 'scoped memory for tpu_custom_call.1']
    #allocation5 [shape = 's32[1]{0}', space=sflag, size = 0x4, scoped, tag = 'scoped memory for tpu_custom_call.1']
    #allocation6 [shape = 'u8[81920]{0}', space=vmem, size = 0x14000, scoped, tag = 'input window, operand 1, single buffered']
    #allocation7 [shape = 's32[1]{0}', space=sflag, size = 0x4, scoped, tag = 'scoped memory for tpu_custom_call.1']
    #allocation8 [shape = 'u8[4096]{0}', space=vmem, size = 0x1000, scoped, tag = 'input window, operand 2, single buffered']
    #allocation9 [shape = 'u8[1048576]{0}', space=vmem, size = 0x100000, scoped, tag = 'input window, operand 3, single buffered']
    #allocation10 [shape = 's32[1]{0}', space=sflag, size = 0x4, scoped, tag = 'scoped memory for tpu_custom_call.1']
    #allocation11 [shape = 'u8[262144]{0}', space=vmem, size = 0x40000, scoped, tag = 'input window, operand 5, single buffered']
    #allocation12 [shape = 'u8[512]{0}', space=vmem, size = 0x400, scoped, tag = 'output window, operand 0, single buffered']
    %16 = vsyncpa [#allocation4], 0
    %17 = vsyncpa [#allocation7], 0
    %18 = vsyncpa [#allocation10], 0
    %19 = vsyncpa [#allocation5], 0
    // Predicated region
    $region2: #{tpu_custom_call.1} parent=1 // pred_check
      _
    $region3: #{tpu_custom_call.1} parent=1 // pred_check_branch
      %21 = sbr.rel (0) target = $region5
    $region4: #{tpu_custom_call.1} parent=1 // pred_region
      %s23 = ssub.s32 64, 64
      %24 = vsyncadd [#allocation4], %s23
      %s26 = sshll.u32 [#allocation3], 4
      %s27 = int_to_ptr.vmem [resolvable:$true] %s26
      %29 = dma.hbm_to_vmem [thread:$0]  %s0, 64, %s27, [#allocation4]
    $region5: #{tpu_custom_call.1} parent=1 // pred_fallthru
      _
    // Predicated region
    $region6: #{tpu_custom_call.1} parent=1 // pred_check
      _
    $region7: #{tpu_custom_call.1} parent=1 // pred_check_branch
      %31 = sbr.rel (0) target = $region9
    $region8: #{tpu_custom_call.1} parent=1 // pred_region
      %s33 = ssub.s32 2560, 2560
      %34 = vsyncadd [#allocation7], %s33
      %s35 = sshll.u32 [#allocation6], 4
      %s36 = int_to_ptr.vmem [resolvable:$true] %s35
      %41 = dma.hbm_to_vmem [thread:$0]  %s1, 2560, %s36, [#allocation7], 512, 512, 32
    $region9: #{tpu_custom_call.1} parent=1 // pred_fallthru
      _
    // Predicated region
    $region10: #{tpu_custom_call.1} parent=1 // pred_check
      _
    $region11: #{tpu_custom_call.1} parent=1 // pred_check_branch
      %43 = sbr.rel (0) target = $region13
    $region12: #{tpu_custom_call.1} parent=1 // pred_region
      %s45 = ssub.s32 128, 128
      %46 = vsyncadd [#allocation7], %s45
      %s48 = sshll.u32 [#allocation8], 4
      %s49 = int_to_ptr.vmem [resolvable:$true] %s48
      %51 = dma.hbm_to_vmem [thread:$0]  %s2, 128, %s49, [#allocation7]
    $region13: #{tpu_custom_call.1} parent=1 // pred_fallthru
      _
    // Predicated region
    $region14: #{tpu_custom_call.1} parent=1 // pred_check
      _
    $region15: #{tpu_custom_call.1} parent=1 // pred_check_branch
      %53 = sbr.rel (0) target = $region17
    $region16: #{tpu_custom_call.1} parent=1 // pred_region
      %s55 = ssub.s32 32768, 32768
      %56 = vsyncadd [#allocation10], %s55
      %s57 = sshll.u32 [#allocation9], 4
      %s58 = int_to_ptr.vmem [resolvable:$true] %s57
      %63 = dma.hbm_to_vmem [thread:$0]  %s3, 32768, %s58, [#allocation10], 256, 256, 16
    $region17: #{tpu_custom_call.1} parent=1 // pred_fallthru
      _
    // Predicated region
    $region18: #{tpu_custom_call.1} parent=1 // pred_check
      _
    $region19: #{tpu_custom_call.1} parent=1 // pred_check_branch
      %65 = sbr.rel (0) target = $region21
    $region20: #{tpu_custom_call.1} parent=1 // pred_region
      _
    $region21: #{tpu_custom_call.1} parent=1 // pred_fallthru
      _
    // Predicated region
    $region22: #{tpu_custom_call.1} parent=1 // pred_check
      _
    $region23: #{tpu_custom_call.1} parent=1 // pred_check_branch
      %67 = sbr.rel (0) target = $region25
    $region24: #{tpu_custom_call.1} parent=1 // pred_region
      %s69 = ssub.s32 8192, 8192
      %70 = vsyncadd [#allocation10], %s69
      %s71 = sshll.u32 [#allocation11], 4
      %s72 = int_to_ptr.vmem [resolvable:$true] %s71
      %77 = dma.hbm_to_vmem [thread:$0]  %s5, 8192, %s72, [#allocation10], 128, 128, 8
    $region25: #{tpu_custom_call.1} parent=1 // pred_fallthru
      _
    // Predicated region
    $region26: #{tpu_custom_call.1} parent=1 // pred_check
      _
    $region27: #{tpu_custom_call.1} parent=1 // pred_check_branch
      %79 = sbr.rel (0) target = $region29
    $region28: #{tpu_custom_call.1} parent=1 // pred_region
      _
    $region29: #{tpu_custom_call.1} parent=1 // pred_fallthru
      _
    // Predicated region
    $region30: #{tpu_custom_call.1} parent=1 // pred_check
      _
    $region31: #{tpu_custom_call.1} parent=1 // pred_check_branch
      %81 = sbr.rel (0) target = $region33
    $region32: #{tpu_custom_call.1} parent=1 // pred_region
      _
    $region33: #{tpu_custom_call.1} parent=1 // pred_fallthru
      _
    // Predicated region
    $region34: #{tpu_custom_call.1} parent=1 // pred_check
      _
    $region35: #{tpu_custom_call.1} parent=1 // pred_check_branch
      %83 = sbr.rel (0) target = $region37
    $region36: #{tpu_custom_call.1} parent=1 // pred_region
      _
    $region37: #{tpu_custom_call.1} parent=1 // pred_fallthru
      _
    // Predicated region
    $region38: #{tpu_custom_call.1} parent=1 // pred_check
      _
    $region39: #{tpu_custom_call.1} parent=1 // pred_check_branch
      %85 = sbr.rel (0) target = $region41
    $region40: #{tpu_custom_call.1} parent=1 // pred_region
      %86 = dma.done [#allocation4], 64
    $region41: #{tpu_custom_call.1} parent=1 // pred_fallthru
      _
    // Predicated region
    $region42: #{tpu_custom_call.1} parent=1 // pred_check
      _
    $region43: #{tpu_custom_call.1} parent=1 // pred_check_branch
      %88 = sbr.rel (0) target = $region45
    $region44: #{tpu_custom_call.1} parent=1 // pred_region
      %89 = dma.done [#allocation7], 2560
    $region45: #{tpu_custom_call.1} parent=1 // pred_fallthru
      _
    // Predicated region
    $region46: #{tpu_custom_call.1} parent=1 // pred_check
      _
    $region47: #{tpu_custom_call.1} parent=1 // pred_check_branch
      %91 = sbr.rel (0) target = $region49
    $region48: #{tpu_custom_call.1} parent=1 // pred_region
      %92 = dma.done [#allocation7], 128
    $region49: #{tpu_custom_call.1} parent=1 // pred_fallthru
      _
    // Predicated region
    $region50: #{tpu_custom_call.1} parent=1 // pred_check
      _
    $region51: #{tpu_custom_call.1} parent=1 // pred_check_branch
      %94 = sbr.rel (0) target = $region53
    $region52: #{tpu_custom_call.1} parent=1 // pred_region
      %95 = dma.done [#allocation10], 32768
    $region53: #{tpu_custom_call.1} parent=1 // pred_fallthru
      _
    // Predicated region
    $region54: #{tpu_custom_call.1} parent=1 // pred_check
      _
    $region55: #{tpu_custom_call.1} parent=1 // pred_check_branch
      %97 = sbr.rel (0) target = $region57
    $region56: #{tpu_custom_call.1} parent=1 // pred_region
      %98 = dma.done [#allocation10], 8192
    $region57: #{tpu_custom_call.1} parent=1 // pred_fallthru
      _
    %v100 = vld [vmem:[#allocation3] sm:$0xf]
    %v101 = vld [vmem:[#allocation6] sm:$0xff]
    %v102 = vld [vmem:[#allocation6 + $0x8] sm:$0xff]
    %v103 = vld [vmem:[#allocation6 + $0x10] sm:$0xff]
    %v104 = vld [vmem:[#allocation6 + $0x18] sm:$0xff]
    %v105 = vld [vmem:[#allocation6 + $0x20] sm:$0xff]
    %v106 = vld [vmem:[#allocation6 + $0x28] sm:$0xff]
    %v107 = vld [vmem:[#allocation6 + $0x30] sm:$0xff]
    %v108 = vld [vmem:[#allocation6 + $0x38] sm:$0xff]
    %v109 = vld [vmem:[#allocation6 + $0x40] sm:$0xff]
    %v110 = vld [vmem:[#allocation6 + $0x48] sm:$0xff]
    %v111 = vld [vmem:[#allocation6 + $0x50] sm:$0xff]
    %v112 = vld [vmem:[#allocation6 + $0x58] sm:$0xff]
    %v113 = vld [vmem:[#allocation6 + $0x60] sm:$0xff]
    %v114 = vld [vmem:[#allocation6 + $0x68] sm:$0xff]
    %v115 = vld [vmem:[#allocation6 + $0x70] sm:$0xff]
    %v116 = vld [vmem:[#allocation6 + $0x78] sm:$0xff]
    %v117 = vld [vmem:[#allocation6 + $0x80] sm:$0xff]
    %v118 = vld [vmem:[#allocation6 + $0x88] sm:$0xff]
    %v119 = vld [vmem:[#allocation6 + $0x90] sm:$0xff]
    %v120 = vld [vmem:[#allocation6 + $0x98] sm:$0xff]
    %v121 = vld [vmem:[#allocation8] sm:$0xff]
    %v123 = vlaneseq
    %v124 = vshrl.u32 %v123, 7
    %v125 = vsub.s32 0, %v124
    %v126 = vrot.slane %v121, %v125
    %v127 = vlaneseq
    %v128 = vshrl.u32 %v127, 7
    %v129 = vsub.s32 1, %v128
    %v130 = vrot.slane %v121, %v129
    %v131 = vlaneseq
    %v132 = vshrl.u32 %v131, 7
    %v133 = vsub.s32 2, %v132
    %v134 = vrot.slane %v121, %v133
    %v135 = vlaneseq
    %v136 = vshrl.u32 %v135, 7
    %v137 = vsub.s32 3, %v136
    %v138 = vrot.slane %v121, %v137
    %v139 = vlaneseq
    %v140 = vshrl.u32 %v139, 7
    %v141 = vsub.s32 4, %v140
    %v142 = vrot.slane %v121, %v141
    %v143 = vlaneseq
    %v144 = vshrl.u32 %v143, 7
    %v145 = vsub.s32 5, %v144
    %v146 = vrot.slane %v121, %v145
    %v147 = vlaneseq
    %v148 = vshrl.u32 %v147, 7
    %v149 = vsub.s32 6, %v148
    %v150 = vrot.slane %v121, %v149
    %v151 = vlaneseq
    %v152 = vshrl.u32 %v151, 7
    %v153 = vsub.s32 7, %v152
    %v154 = vrot.slane %v121, %v153
    %v183 = vunpack.c.l.b16 %v101
    %v184 = vunpack.c.h.b16 %v101
    %v185 = vunpack.c.l.b16 %v102
    %v186 = vunpack.c.h.b16 %v102
    %v187 = vunpack.c.l.b16 %v103
    %v188 = vunpack.c.h.b16 %v103
    %v189 = vunpack.c.l.b16 %v104
    %v190 = vunpack.c.h.b16 %v104
    %v191 = vunpack.c.l.b16 %v105
    %v192 = vunpack.c.h.b16 %v105
    %v193 = vunpack.c.l.b16 %v106
    %v194 = vunpack.c.h.b16 %v106
    %v195 = vunpack.c.l.b16 %v107
    %v196 = vunpack.c.h.b16 %v107
    %v197 = vunpack.c.l.b16 %v108
    %v198 = vunpack.c.h.b16 %v108
    %v199 = vunpack.c.l.b16 %v109
    %v200 = vunpack.c.h.b16 %v109
    %v201 = vunpack.c.l.b16 %v110
    %v202 = vunpack.c.h.b16 %v110
    %v203 = vunpack.c.l.b16 %v111
    %v204 = vunpack.c.h.b16 %v111
    %v205 = vunpack.c.l.b16 %v112
    %v206 = vunpack.c.h.b16 %v112
    %v207 = vunpack.c.l.b16 %v113
    %v208 = vunpack.c.h.b16 %v113
    %v209 = vunpack.c.l.b16 %v114
    %v210 = vunpack.c.h.b16 %v114
    %v211 = vunpack.c.l.b16 %v115
    %v212 = vunpack.c.h.b16 %v115
    %v213 = vunpack.c.l.b16 %v116
    %v214 = vunpack.c.h.b16 %v116
    %v215 = vunpack.c.l.b16 %v117
    %v216 = vunpack.c.h.b16 %v117
    %v217 = vunpack.c.l.b16 %v118
    %v218 = vunpack.c.h.b16 %v118
    %v219 = vunpack.c.l.b16 %v119
    %v220 = vunpack.c.h.b16 %v119
    %v221 = vunpack.c.l.b16 %v120
    %v222 = vunpack.c.h.b16 %v120
    %v223 = vpack.c.b16 %v191, %v183
    %v224 = vpack.c.b16 %v192, %v184
    %v225 = vpack.c.b16 %v193, %v185
    %v226 = vpack.c.b16 %v194, %v186
    %v227 = vpack.c.b16 %v195, %v187
    %v228 = vpack.c.b16 %v196, %v188
    %v229 = vpack.c.b16 %v197, %v189
    %v230 = vpack.c.b16 %v198, %v190
    %v231 = vpack.c.b16 %v207, %v199
    %v232 = vpack.c.b16 %v208, %v200
    %v233 = vpack.c.b16 %v209, %v201
    %v234 = vpack.c.b16 %v210, %v202
    %v235 = vpack.c.b16 %v211, %v203
    %v236 = vpack.c.b16 %v212, %v204
    %v237 = vpack.c.b16 %v213, %v205
    %v238 = vpack.c.b16 %v214, %v206
    %v239 = vpack.c.b16 %v215, %v215
    %v240 = vpack.c.b16 %v216, %v216
    %v241 = vpack.c.b16 %v217, %v217
    %v242 = vpack.c.b16 %v218, %v218
    %v243 = vpack.c.b16 %v219, %v219
    %v244 = vpack.c.b16 %v220, %v220
    %v245 = vpack.c.b16 %v221, %v221
    %v246 = vpack.c.b16 %v222, %v222
    %vm263 = vcmask 326656
    %v265 = vsel %vm263, %v100, 0
    %vm267 = vcmask 1043456
    %v269 = vsel %vm267, %v239, 0
    %v272 = vsel %vm267, %v240, 0
    %v275 = vsel %vm267, %v241, 0
    %v278 = vsel %vm267, %v242, 0
    %v281 = vsel %vm267, %v243, 0
    %v284 = vsel %vm267, %v244, 0
    %v287 = vsel %vm267, %v245, 0
    %v290 = vsel %vm267, %v246, 0
    %292 = vmatprep.subr.bf16.mxu0 0
    %293 = vmatpush1.bf16.msra.mxu0 0
    %294 = vmatprep.subr.bf16.mxu0 0
    %295 = vmatpush1.bf16.msra.mxu0 0
    %296 = vmatprep.subr.bf16.mxu0 0
    %297 = vmatpush1.bf16.msra.mxu0 0
    %298 = vmatprep.subr.bf16.mxu0 0
    %299 = vmatpush1.bf16.msra.mxu0 0
    %300 = vmatprep.subr.bf16.mxu0 0
    %301 = vmatpush1.bf16.msra.mxu0 0
    %302 = vmatprep.subr.bf16.mxu0 %v272
    %303 = vmatpush1.bf16.msra.mxu0 %v269
    %304 = vmatprep.subr.bf16.mxu0 %v232
    %305 = vmatpush1.bf16.msra.mxu0 %v231
    %306 = vmatprep.subr.bf16.mxu0 %v224
    %307 = vmatpush1.bf16.msra.mxu0 %v223
    %308 = vmatprep.subr.bf16.mxu0 0
    %309 = vmatpush2.bf16.msra.mxu0 0
    %310 = vmatprep.subr.bf16.mxu0 0
    %311 = vmatpush2.bf16.msra.mxu0 0
    %312 = vmatprep.subr.bf16.mxu0 0
    %313 = vmatpush2.bf16.msra.mxu0 0
    %314 = vmatprep.subr.bf16.mxu0 0
    %315 = vmatpush2.bf16.msra.mxu0 0
    %316 = vmatprep.subr.bf16.mxu0 0
    %317 = vmatpush2.bf16.msra.mxu0 0
    %318 = vmatprep.subr.bf16.mxu0 0
    %319 = vmatpush2.bf16.msra.mxu0 0
    %320 = vmatprep.subr.bf16.mxu0 0
    %321 = vmatpush2.bf16.msra.mxu0 0
    %322 = vmatprep.subr.bf16.mxu0 0
    %323 = vmatpush2.bf16.msra.mxu0 0
    %324 = vmatprep.mubr.bf16.mxu0 0
    %325 = vmatmul.mubr.bf16.gmra.mxu0 %v265
    %v326 = vpop.f32.mrf.mxu0
    %v327 = vadd.f32 %v126, %v326
    %v328 = vpop.f32.mrf.mxu0
    %v329 = vadd.f32 %v130, %v328
    %v330 = vpop.f32.mrf.mxu0
    %v331 = vpop.f32.mrf.mxu0
    %332 = vdwg.mxu0
    %333 = vmatprep.subr.bf16.mxu0 0
    %334 = vmatpush1.bf16.msra.mxu0 0
    %335 = vmatprep.subr.bf16.mxu0 0
    %336 = vmatpush1.bf16.msra.mxu0 0
    %337 = vmatprep.subr.bf16.mxu0 0
    %338 = vmatpush1.bf16.msra.mxu0 0
    %339 = vmatprep.subr.bf16.mxu0 0
    %340 = vmatpush1.bf16.msra.mxu0 0
    %341 = vmatprep.subr.bf16.mxu0 0
    %342 = vmatpush1.bf16.msra.mxu0 0
    %343 = vmatprep.subr.bf16.mxu0 %v278
    %344 = vmatpush1.bf16.msra.mxu0 %v275
    %345 = vmatprep.subr.bf16.mxu0 %v234
    %346 = vmatpush1.bf16.msra.mxu0 %v233
    %347 = vmatprep.subr.bf16.mxu0 %v226
    %348 = vmatpush1.bf16.msra.mxu0 %v225
    %349 = vmatprep.subr.bf16.mxu0 0
    %350 = vmatpush2.bf16.msra.mxu0 0
    %351 = vmatprep.subr.bf16.mxu0 0
    %352 = vmatpush2.bf16.msra.mxu0 0
    %353 = vmatprep.subr.bf16.mxu0 0
    %354 = vmatpush2.bf16.msra.mxu0 0
    %355 = vmatprep.subr.bf16.mxu0 0
    %356 = vmatpush2.bf16.msra.mxu0 0
    %357 = vmatprep.subr.bf16.mxu0 0
    %358 = vmatpush2.bf16.msra.mxu0 0
    %359 = vmatprep.subr.bf16.mxu0 0
    %360 = vmatpush2.bf16.msra.mxu0 0
    %361 = vmatprep.subr.bf16.mxu0 0
    %362 = vmatpush2.bf16.msra.mxu0 0
    %363 = vmatprep.subr.bf16.mxu0 0
    %364 = vmatpush2.bf16.msra.mxu0 0
    %365 = vmatprep.mubr.bf16.mxu0 0
    %366 = vmatmul.mubr.bf16.gmra.mxu0 %v265
    %v367 = vpop.f32.mrf.mxu0
    %v368 = vadd.f32 %v134, %v367
    %v369 = vpop.f32.mrf.mxu0
    %v370 = vadd.f32 %v138, %v369
    %v371 = vpop.f32.mrf.mxu0
    %v372 = vpop.f32.mrf.mxu0
    %373 = vdwg.mxu0
    %374 = vmatprep.subr.bf16.mxu0 0
    %375 = vmatpush1.bf16.msra.mxu0 0
    %376 = vmatprep.subr.bf16.mxu0 0
    %377 = vmatpush1.bf16.msra.mxu0 0
    %378 = vmatprep.subr.bf16.mxu0 0
    %379 = vmatpush1.bf16.msra.mxu0 0
    %380 = vmatprep.subr.bf16.mxu0 0
    %381 = vmatpush1.bf16.msra.mxu0 0
    %382 = vmatprep.subr.bf16.mxu0 0
    %383 = vmatpush1.bf16.msra.mxu0 0
    %384 = vmatprep.subr.bf16.mxu0 %v284
    %385 = vmatpush1.bf16.msra.mxu0 %v281
    %386 = vmatprep.subr.bf16.mxu0 %v236
    %387 = vmatpush1.bf16.msra.mxu0 %v235
    %388 = vmatprep.subr.bf16.mxu0 %v228
    %389 = vmatpush1.bf16.msra.mxu0 %v227
    %390 = vmatprep.subr.bf16.mxu0 0
    %391 = vmatpush2.bf16.msra.mxu0 0
    %392 = vmatprep.subr.bf16.mxu0 0
    %393 = vmatpush2.bf16.msra.mxu0 0
    %394 = vmatprep.subr.bf16.mxu0 0
    %395 = vmatpush2.bf16.msra.mxu0 0
    %396 = vmatprep.subr.bf16.mxu0 0
    %397 = vmatpush2.bf16.msra.mxu0 0
    %398 = vmatprep.subr.bf16.mxu0 0
    %399 = vmatpush2.bf16.msra.mxu0 0
    %400 = vmatprep.subr.bf16.mxu0 0
    %401 = vmatpush2.bf16.msra.mxu0 0
    %402 = vmatprep.subr.bf16.mxu0 0
    %403 = vmatpush2.bf16.msra.mxu0 0
    %404 = vmatprep.subr.bf16.mxu0 0
    %405 = vmatpush2.bf16.msra.mxu0 0
    %406 = vmatprep.mubr.bf16.mxu0 0
    %407 = vmatmul.mubr.bf16.gmra.mxu0 %v265
    %v408 = vpop.f32.mrf.mxu0
    %v409 = vadd.f32 %v142, %v408
    %v410 = vpop.f32.mrf.mxu0
    %v411 = vadd.f32 %v146, %v410
    %v412 = vpop.f32.mrf.mxu0
    %v413 = vpop.f32.mrf.mxu0
    %414 = vdwg.mxu0
    %415 = vmatprep.subr.bf16.mxu0 0
    %416 = vmatpush1.bf16.msra.mxu0 0
    %417 = vmatprep.subr.bf16.mxu0 0
    %418 = vmatpush1.bf16.msra.mxu0 0
    %419 = vmatprep.subr.bf16.mxu0 0
    %420 = vmatpush1.bf16.msra.mxu0 0
    %421 = vmatprep.subr.bf16.mxu0 0
    %422 = vmatpush1.bf16.msra.mxu0 0
    %423 = vmatprep.subr.bf16.mxu0 0
    %424 = vmatpush1.bf16.msra.mxu0 0
    %425 = vmatprep.subr.bf16.mxu0 %v290
    %426 = vmatpush1.bf16.msra.mxu0 %v287
    %427 = vmatprep.subr.bf16.mxu0 %v238
    %428 = vmatpush1.bf16.msra.mxu0 %v237
    %429 = vmatprep.subr.bf16.mxu0 %v230
    %430 = vmatpush1.bf16.msra.mxu0 %v229
    %431 = vmatprep.subr.bf16.mxu0 0
    %432 = vmatpush2.bf16.msra.mxu0 0
    %433 = vmatprep.subr.bf16.mxu0 0
    %434 = vmatpush2.bf16.msra.mxu0 0
    %435 = vmatprep.subr.bf16.mxu0 0
    %436 = vmatpush2.bf16.msra.mxu0 0
    %437 = vmatprep.subr.bf16.mxu0 0
    %438 = vmatpush2.bf16.msra.mxu0 0
    %439 = vmatprep.subr.bf16.mxu0 0
    %440 = vmatpush2.bf16.msra.mxu0 0
    %441 = vmatprep.subr.bf16.mxu0 0
    %442 = vmatpush2.bf16.msra.mxu0 0
    %443 = vmatprep.subr.bf16.mxu0 0
    %444 = vmatpush2.bf16.msra.mxu0 0
    %445 = vmatprep.subr.bf16.mxu0 0
    %446 = vmatpush2.bf16.msra.mxu0 0
    %447 = vmatprep.mubr.bf16.mxu0 0
    %448 = vmatmul.mubr.bf16.gmra.mxu0 %v265
    %v449 = vpop.f32.mrf.mxu0
    %v450 = vadd.f32 %v150, %v449
    %v451 = vpop.f32.mrf.mxu0
    %v452 = vadd.f32 %v154, %v451
    %v453 = vpop.f32.mrf.mxu0
    %v454 = vpop.f32.mrf.mxu0
    %455 = vdwg.mxu0
    %vm456 = vcmp.gt.f32.partialorder %v327, 0.0
    %vm457 = vcmp.gt.f32.partialorder %v329, 0.0
    %vm458 = vcmp.gt.f32.partialorder %v368, 0.0
    %vm459 = vcmp.gt.f32.partialorder %v370, 0.0
    %vm460 = vcmp.gt.f32.partialorder %v409, 0.0
    %vm461 = vcmp.gt.f32.partialorder %v411, 0.0
    %vm462 = vcmp.gt.f32.partialorder %v450, 0.0
    %vm463 = vcmp.gt.f32.partialorder %v452, 0.0
    %v464 = vmul.f32 %v327, 0.01
    %v465 = vmul.f32 %v329, 0.01
    %v466 = vmul.f32 %v368, 0.01
    %v467 = vmul.f32 %v370, 0.01
    %v468 = vmul.f32 %v409, 0.01
    %v469 = vmul.f32 %v411, 0.01
    %v470 = vmul.f32 %v450, 0.01
    %v471 = vmul.f32 %v452, 0.01
    %v472 = vsel %vm456, %v327, %v464
    %v473 = vsel %vm457, %v329, %v465
    %v474 = vsel %vm458, %v368, %v466
    %v475 = vsel %vm459, %v370, %v467
    %v476 = vsel %vm460, %v409, %v468
    %v477 = vsel %vm461, %v411, %v469
    %v478 = vsel %vm462, %v450, %v470
    %v479 = vsel %vm463, %v452, %v471
    %v480 = vpack.c.bf16 %v472, %v472
    %v481 = vpack.c.bf16 %v473, %v473
    %v482 = vpack.c.bf16 %v474, %v474
    %v483 = vpack.c.bf16 %v475, %v475
    %v484 = vpack.c.bf16 %v476, %v476
    %v485 = vpack.c.bf16 %v477, %v477
    %v486 = vpack.c.bf16 %v478, %v478
    %v487 = vpack.c.bf16 %v479, %v479
    %v488 = vld [vmem:[#allocation9] sm:$0xff]
    %v489 = vld [vmem:[#allocation9 + $0x8] sm:$0xff]
    %v490 = vld [vmem:[#allocation9 + $0x10] sm:$0xff]
    %v491 = vld [vmem:[#allocation9 + $0x18] sm:$0xff]
    %v492 = vld [vmem:[#allocation9 + $0x20] sm:$0xff]
    %v493 = vld [vmem:[#allocation9 + $0x28] sm:$0xff]
    %v494 = vld [vmem:[#allocation9 + $0x30] sm:$0xff]
    %v495 = vld [vmem:[#allocation9 + $0x38] sm:$0xff]
    %v496 = vld [vmem:[#allocation9 + $0x40] sm:$0xff]
    %v497 = vld [vmem:[#allocation9 + $0x48] sm:$0xff]
    %v498 = vld [vmem:[#allocation9 + $0x50] sm:$0xff]
    %v499 = vld [vmem:[#allocation9 + $0x58] sm:$0xff]
    %v500 = vld [vmem:[#allocation9 + $0x60] sm:$0xff]
    %v501 = vld [vmem:[#allocation9 + $0x68] sm:$0xff]
    %v502 = vld [vmem:[#allocation9 + $0x70] sm:$0xff]
    %v503 = vld [vmem:[#allocation9 + $0x78] sm:$0xff]
    %v504 = vld [vmem:[#allocation9 + $0x80] sm:$0xff]
    %v505 = vld [vmem:[#allocation9 + $0x88] sm:$0xff]
    %v506 = vld [vmem:[#allocation9 + $0x90] sm:$0xff]
    %v507 = vld [vmem:[#allocation9 + $0x98] sm:$0xff]
    %v508 = vld [vmem:[#allocation9 + $0xa0] sm:$0xff]
    %v509 = vld [vmem:[#allocation9 + $0xa8] sm:$0xff]
    %v510 = vld [vmem:[#allocation9 + $0xb0] sm:$0xff]
    %v511 = vld [vmem:[#allocation9 + $0xb8] sm:$0xff]
    %v512 = vld [vmem:[#allocation9 + $0xc0] sm:$0xff]
    %v513 = vld [vmem:[#allocation9 + $0xc8] sm:$0xff]
    %v514 = vld [vmem:[#allocation9 + $0xd0] sm:$0xff]
    %v515 = vld [vmem:[#allocation9 + $0xd8] sm:$0xff]
    %v516 = vld [vmem:[#allocation9 + $0xe0] sm:$0xff]
    %v517 = vld [vmem:[#allocation9 + $0xe8] sm:$0xff]
    %v518 = vld [vmem:[#allocation9 + $0xf0] sm:$0xff]
    %v519 = vld [vmem:[#allocation9 + $0xf8] sm:$0xff]
    %v520 = vld [vmem:[#allocation9 + $0x100] sm:$0xff]
    %v521 = vld [vmem:[#allocation9 + $0x108] sm:$0xff]
    %v522 = vld [vmem:[#allocation9 + $0x110] sm:$0xff]
    %v523 = vld [vmem:[#allocation9 + $0x118] sm:$0xff]
    %v524 = vld [vmem:[#allocation9 + $0x120] sm:$0xff]
    %v525 = vld [vmem:[#allocation9 + $0x128] sm:$0xff]
    %v526 = vld [vmem:[#allocation9 + $0x130] sm:$0xff]
    %v527 = vld [vmem:[#allocation9 + $0x138] sm:$0xff]
    %v528 = vld [vmem:[#allocation9 + $0x140] sm:$0xff]
    %v529 = vld [vmem:[#allocation9 + $0x148] sm:$0xff]
    %v530 = vld [vmem:[#allocation9 + $0x150] sm:$0xff]
    %v531 = vld [vmem:[#allocation9 + $0x158] sm:$0xff]
    %v532 = vld [vmem:[#allocation9 + $0x160] sm:$0xff]
    %v533 = vld [vmem:[#allocation9 + $0x168] sm:$0xff]
    %v534 = vld [vmem:[#allocation9 + $0x170] sm:$0xff]
    %v535 = vld [vmem:[#allocation9 + $0x178] sm:$0xff]
    %v536 = vld [vmem:[#allocation9 + $0x180] sm:$0xff]
    %v537 = vld [vmem:[#allocation9 + $0x188] sm:$0xff]
    %v538 = vld [vmem:[#allocation9 + $0x190] sm:$0xff]
    %v539 = vld [vmem:[#allocation9 + $0x198] sm:$0xff]
    %v540 = vld [vmem:[#allocation9 + $0x1a0] sm:$0xff]
    %v541 = vld [vmem:[#allocation9 + $0x1a8] sm:$0xff]
    %v542 = vld [vmem:[#allocation9 + $0x1b0] sm:$0xff]
    %v543 = vld [vmem:[#allocation9 + $0x1b8] sm:$0xff]
    %v544 = vld [vmem:[#allocation9 + $0x1c0] sm:$0xff]
    %v545 = vld [vmem:[#allocation9 + $0x1c8] sm:$0xff]
    %v546 = vld [vmem:[#allocation9 + $0x1d0] sm:$0xff]
    %v547 = vld [vmem:[#allocation9 + $0x1d8] sm:$0xff]
    %v548 = vld [vmem:[#allocation9 + $0x1e0] sm:$0xff]
    %v549 = vld [vmem:[#allocation9 + $0x1e8] sm:$0xff]
    %v550 = vld [vmem:[#allocation9 + $0x1f0] sm:$0xff]
    %v551 = vld [vmem:[#allocation9 + $0x1f8] sm:$0xff]
    %v552 = vld [vmem:[#allocation9 + $0x200] sm:$0xff]
    %v553 = vld [vmem:[#allocation9 + $0x208] sm:$0xff]
    %v554 = vld [vmem:[#allocation9 + $0x210] sm:$0xff]
    %v555 = vld [vmem:[#allocation9 + $0x218] sm:$0xff]
    %v556 = vld [vmem:[#allocation9 + $0x220] sm:$0xff]
    %v557 = vld [vmem:[#allocation9 + $0x228] sm:$0xff]
    %v558 = vld [vmem:[#allocation9 + $0x230] sm:$0xff]
    %v559 = vld [vmem:[#allocation9 + $0x238] sm:$0xff]
    %v560 = vld [vmem:[#allocation9 + $0x240] sm:$0xff]
    %v561 = vld [vmem:[#allocation9 + $0x248] sm:$0xff]
    %v562 = vld [vmem:[#allocation9 + $0x250] sm:$0xff]
    %v563 = vld [vmem:[#allocation9 + $0x258] sm:$0xff]
    %v564 = vld [vmem:[#allocation9 + $0x260] sm:$0xff]
    %v565 = vld [vmem:[#allocation9 + $0x268] sm:$0xff]
    %v566 = vld [vmem:[#allocation9 + $0x270] sm:$0xff]
    %v567 = vld [vmem:[#allocation9 + $0x278] sm:$0xff]
    %v568 = vld [vmem:[#allocation9 + $0x280] sm:$0xff]
    %v569 = vld [vmem:[#allocation9 + $0x288] sm:$0xff]
    %v570 = vld [vmem:[#allocation9 + $0x290] sm:$0xff]
    %v571 = vld [vmem:[#allocation9 + $0x298] sm:$0xff]
    %v572 = vld [vmem:[#allocation9 + $0x2a0] sm:$0xff]
    %v573 = vld [vmem:[#allocation9 + $0x2a8] sm:$0xff]
    %v574 = vld [vmem:[#allocation9 + $0x2b0] sm:$0xff]
    %v575 = vld [vmem:[#allocation9 + $0x2b8] sm:$0xff]
    %v576 = vld [vmem:[#allocation9 + $0x2c0] sm:$0xff]
    %v577 = vld [vmem:[#allocation9 + $0x2c8] sm:$0xff]
    %v578 = vld [vmem:[#allocation9 + $0x2d0] sm:$0xff]
    %v579 = vld [vmem:[#allocation9 + $0x2d8] sm:$0xff]
    %v580 = vld [vmem:[#allocation9 + $0x2e0] sm:$0xff]
    %v581 = vld [vmem:[#allocation9 + $0x2e8] sm:$0xff]
    %v582 = vld [vmem:[#allocation9 + $0x2f0] sm:$0xff]
    %v583 = vld [vmem:[#allocation9 + $0x2f8] sm:$0xff]
    %v584 = vld [vmem:[#allocation9 + $0x300] sm:$0xff]
    %v585 = vld [vmem:[#allocation9 + $0x308] sm:$0xff]
    %v586 = vld [vmem:[#allocation9 + $0x310] sm:$0xff]
    %v587 = vld [vmem:[#allocation9 + $0x318] sm:$0xff]
    %v588 = vld [vmem:[#allocation9 + $0x320] sm:$0xff]
    %v589 = vld [vmem:[#allocation9 + $0x328] sm:$0xff]
    %v590 = vld [vmem:[#allocation9 + $0x330] sm:$0xff]
    %v591 = vld [vmem:[#allocation9 + $0x338] sm:$0xff]
    %v592 = vld [vmem:[#allocation9 + $0x340] sm:$0xff]
    %v593 = vld [vmem:[#allocation9 + $0x348] sm:$0xff]
    %v594 = vld [vmem:[#allocation9 + $0x350] sm:$0xff]
    %v595 = vld [vmem:[#allocation9 + $0x358] sm:$0xff]
    %v596 = vld [vmem:[#allocation9 + $0x360] sm:$0xff]
    %v597 = vld [vmem:[#allocation9 + $0x368] sm:$0xff]
    %v598 = vld [vmem:[#allocation9 + $0x370] sm:$0xff]
    %v599 = vld [vmem:[#allocation9 + $0x378] sm:$0xff]
    %v600 = vld [vmem:[#allocation9 + $0x380] sm:$0xff]
    %v601 = vld [vmem:[#allocation9 + $0x388] sm:$0xff]
    %v602 = vld [vmem:[#allocation9 + $0x390] sm:$0xff]
    %v603 = vld [vmem:[#allocation9 + $0x398] sm:$0xff]
    %v604 = vld [vmem:[#allocation9 + $0x3a0] sm:$0xff]
    %v605 = vld [vmem:[#allocation9 + $0x3a8] sm:$0xff]
    %v606 = vld [vmem:[#allocation9 + $0x3b0] sm:$0xff]
    %v607 = vld [vmem:[#allocation9 + $0x3b8] sm:$0xff]
    %v608 = vld [vmem:[#allocation9 + $0x3c0] sm:$0xff]
    %v609 = vld [vmem:[#allocation9 + $0x3c8] sm:$0xff]
    %v610 = vld [vmem:[#allocation9 + $0x3d0] sm:$0xff]
    %v611 = vld [vmem:[#allocation9 + $0x3d8] sm:$0xff]
    %v612 = vld [vmem:[#allocation9 + $0x3e0] sm:$0xff]
    %v613 = vld [vmem:[#allocation9 + $0x3e8] sm:$0xff]
    %v614 = vld [vmem:[#allocation9 + $0x3f0] sm:$0xff]
    %v615 = vld [vmem:[#allocation9 + $0x3f8] sm:$0xff]
    %v616 = vld [vmem:[#allocation9 + $0x400] sm:$0xff]
    %v617 = vld [vmem:[#allocation9 + $0x408] sm:$0xff]
    %v618 = vld [vmem:[#allocation9 + $0x410] sm:$0xff]
    %v619 = vld [vmem:[#allocation9 + $0x418] sm:$0xff]
    %v620 = vld [vmem:[#allocation9 + $0x420] sm:$0xff]
    %v621 = vld [vmem:[#allocation9 + $0x428] sm:$0xff]
    %v622 = vld [vmem:[#allocation9 + $0x430] sm:$0xff]
    %v623 = vld [vmem:[#allocation9 + $0x438] sm:$0xff]
    %v624 = vld [vmem:[#allocation9 + $0x440] sm:$0xff]
    %v625 = vld [vmem:[#allocation9 + $0x448] sm:$0xff]
    %v626 = vld [vmem:[#allocation9 + $0x450] sm:$0xff]
    %v627 = vld [vmem:[#allocation9 + $0x458] sm:$0xff]
    %v628 = vld [vmem:[#allocation9 + $0x460] sm:$0xff]
    %v629 = vld [vmem:[#allocation9 + $0x468] sm:$0xff]
    %v630 = vld [vmem:[#allocation9 + $0x470] sm:$0xff]
    %v631 = vld [vmem:[#allocation9 + $0x478] sm:$0xff]
    %v632 = vld [vmem:[#allocation9 + $0x480] sm:$0xff]
    %v633 = vld [vmem:[#allocation9 + $0x488] sm:$0xff]
    %v634 = vld [vmem:[#allocation9 + $0x490] sm:$0xff]
    %v635 = vld [vmem:[#allocation9 + $0x498] sm:$0xff]
    %v636 = vld [vmem:[#allocation9 + $0x4a0] sm:$0xff]
    %v637 = vld [vmem:[#allocation9 + $0x4a8] sm:$0xff]
    %v638 = vld [vmem:[#allocation9 + $0x4b0] sm:$0xff]
    %v639 = vld [vmem:[#allocation9 + $0x4b8] sm:$0xff]
    %v640 = vld [vmem:[#allocation9 + $0x4c0] sm:$0xff]
    %v641 = vld [vmem:[#allocation9 + $0x4c8] sm:$0xff]
    %v642 = vld [vmem:[#allocation9 + $0x4d0] sm:$0xff]
    %v643 = vld [vmem:[#allocation9 + $0x4d8] sm:$0xff]
    %v644 = vld [vmem:[#allocation9 + $0x4e0] sm:$0xff]
    %v645 = vld [vmem:[#allocation9 + $0x4e8] sm:$0xff]
    %v646 = vld [vmem:[#allocation9 + $0x4f0] sm:$0xff]
    %v647 = vld [vmem:[#allocation9 + $0x4f8] sm:$0xff]
    %v648 = vld [vmem:[#allocation9 + $0x500] sm:$0xff]
    %v649 = vld [vmem:[#allocation9 + $0x508] sm:$0xff]
    %v650 = vld [vmem:[#allocation9 + $0x510] sm:$0xff]
    %v651 = vld [vmem:[#allocation9 + $0x518] sm:$0xff]
    %v652 = vld [vmem:[#allocation9 + $0x520] sm:$0xff]
    %v653 = vld [vmem:[#allocation9 + $0x528] sm:$0xff]
    %v654 = vld [vmem:[#allocation9 + $0x530] sm:$0xff]
    %v655 = vld [vmem:[#allocation9 + $0x538] sm:$0xff]
    %v656 = vld [vmem:[#allocation9 + $0x540] sm:$0xff]
    %v657 = vld [vmem:[#allocation9 + $0x548] sm:$0xff]
    %v658 = vld [vmem:[#allocation9 + $0x550] sm:$0xff]
    %v659 = vld [vmem:[#allocation9 + $0x558] sm:$0xff]
    %v660 = vld [vmem:[#allocation9 + $0x560] sm:$0xff]
    %v661 = vld [vmem:[#allocation9 + $0x568] sm:$0xff]
    %v662 = vld [vmem:[#allocation9 + $0x570] sm:$0xff]
    %v663 = vld [vmem:[#allocation9 + $0x578] sm:$0xff]
    %v664 = vld [vmem:[#allocation9 + $0x580] sm:$0xff]
    %v665 = vld [vmem:[#allocation9 + $0x588] sm:$0xff]
    %v666 = vld [vmem:[#allocation9 + $0x590] sm:$0xff]
    %v667 = vld [vmem:[#allocation9 + $0x598] sm:$0xff]
    %v668 = vld [vmem:[#allocation9 + $0x5a0] sm:$0xff]
    %v669 = vld [vmem:[#allocation9 + $0x5a8] sm:$0xff]
    %v670 = vld [vmem:[#allocation9 + $0x5b0] sm:$0xff]
    %v671 = vld [vmem:[#allocation9 + $0x5b8] sm:$0xff]
    %v672 = vld [vmem:[#allocation9 + $0x5c0] sm:$0xff]
    %v673 = vld [vmem:[#allocation9 + $0x5c8] sm:$0xff]
    %v674 = vld [vmem:[#allocation9 + $0x5d0] sm:$0xff]
    %v675 = vld [vmem:[#allocation9 + $0x5d8] sm:$0xff]
    %v676 = vld [vmem:[#allocation9 + $0x5e0] sm:$0xff]
    %v677 = vld [vmem:[#allocation9 + $0x5e8] sm:$0xff]
    %v678 = vld [vmem:[#allocation9 + $0x5f0] sm:$0xff]
    %v679 = vld [vmem:[#allocation9 + $0x5f8] sm:$0xff]
    %v680 = vld [vmem:[#allocation9 + $0x600] sm:$0xff]
    %v681 = vld [vmem:[#allocation9 + $0x608] sm:$0xff]
    %v682 = vld [vmem:[#allocation9 + $0x610] sm:$0xff]
    %v683 = vld [vmem:[#allocation9 + $0x618] sm:$0xff]
    %v684 = vld [vmem:[#allocation9 + $0x620] sm:$0xff]
    %v685 = vld [vmem:[#allocation9 + $0x628] sm:$0xff]
    %v686 = vld [vmem:[#allocation9 + $0x630] sm:$0xff]
    %v687 = vld [vmem:[#allocation9 + $0x638] sm:$0xff]
    %v688 = vld [vmem:[#allocation9 + $0x640] sm:$0xff]
    %v689 = vld [vmem:[#allocation9 + $0x648] sm:$0xff]
    %v690 = vld [vmem:[#allocation9 + $0x650] sm:$0xff]
    %v691 = vld [vmem:[#allocation9 + $0x658] sm:$0xff]
    %v692 = vld [vmem:[#allocation9 + $0x660] sm:$0xff]
    %v693 = vld [vmem:[#allocation9 + $0x668] sm:$0xff]
    %v694 = vld [vmem:[#allocation9 + $0x670] sm:$0xff]
    %v695 = vld [vmem:[#allocation9 + $0x678] sm:$0xff]
    %v696 = vld [vmem:[#allocation9 + $0x680] sm:$0xff]
    %v697 = vld [vmem:[#allocation9 + $0x688] sm:$0xff]
    %v698 = vld [vmem:[#allocation9 + $0x690] sm:$0xff]
    %v699 = vld [vmem:[#allocation9 + $0x698] sm:$0xff]
    %v700 = vld [vmem:[#allocation9 + $0x6a0] sm:$0xff]
    %v701 = vld [vmem:[#allocation9 + $0x6a8] sm:$0xff]
    %v702 = vld [vmem:[#allocation9 + $0x6b0] sm:$0xff]
    %v703 = vld [vmem:[#allocation9 + $0x6b8] sm:$0xff]
    %v704 = vld [vmem:[#allocation9 + $0x6c0] sm:$0xff]
    %v705 = vld [vmem:[#allocation9 + $0x6c8] sm:$0xff]
    %v706 = vld [vmem:[#allocation9 + $0x6d0] sm:$0xff]
    %v707 = vld [vmem:[#allocation9 + $0x6d8] sm:$0xff]
    %v708 = vld [vmem:[#allocation9 + $0x6e0] sm:$0xff]
    %v709 = vld [vmem:[#allocation9 + $0x6e8] sm:$0xff]
    %v710 = vld [vmem:[#allocation9 + $0x6f0] sm:$0xff]
    %v711 = vld [vmem:[#allocation9 + $0x6f8] sm:$0xff]
    %v712 = vld [vmem:[#allocation9 + $0x700] sm:$0xff]
    %v713 = vld [vmem:[#allocation9 + $0x708] sm:$0xff]
    %v714 = vld [vmem:[#allocation9 + $0x710] sm:$0xff]
    %v715 = vld [vmem:[#allocation9 + $0x718] sm:$0xff]
    %v716 = vld [vmem:[#allocation9 + $0x720] sm:$0xff]
    %v717 = vld [vmem:[#allocation9 + $0x728] sm:$0xff]
    %v718 = vld [vmem:[#allocation9 + $0x730] sm:$0xff]
    %v719 = vld [vmem:[#allocation9 + $0x738] sm:$0xff]
    %v720 = vld [vmem:[#allocation9 + $0x740] sm:$0xff]
    %v721 = vld [vmem:[#allocation9 + $0x748] sm:$0xff]
    %v722 = vld [vmem:[#allocation9 + $0x750] sm:$0xff]
    %v723 = vld [vmem:[#allocation9 + $0x758] sm:$0xff]
    %v724 = vld [vmem:[#allocation9 + $0x760] sm:$0xff]
    %v725 = vld [vmem:[#allocation9 + $0x768] sm:$0xff]
    %v726 = vld [vmem:[#allocation9 + $0x770] sm:$0xff]
    %v727 = vld [vmem:[#allocation9 + $0x778] sm:$0xff]
    %v728 = vld [vmem:[#allocation9 + $0x780] sm:$0xff]
    %v729 = vld [vmem:[#allocation9 + $0x788] sm:$0xff]
    %v730 = vld [vmem:[#allocation9 + $0x790] sm:$0xff]
    %v731 = vld [vmem:[#allocation9 + $0x798] sm:$0xff]
    %v732 = vld [vmem:[#allocation9 + $0x7a0] sm:$0xff]
    %v733 = vld [vmem:[#allocation9 + $0x7a8] sm:$0xff]
    %v734 = vld [vmem:[#allocation9 + $0x7b0] sm:$0xff]
    %v735 = vld [vmem:[#allocation9 + $0x7b8] sm:$0xff]
    %v736 = vld [vmem:[#allocation9 + $0x7c0] sm:$0xff]
    %v737 = vld [vmem:[#allocation9 + $0x7c8] sm:$0xff]
    %v738 = vld [vmem:[#allocation9 + $0x7d0] sm:$0xff]
    %v739 = vld [vmem:[#allocation9 + $0x7d8] sm:$0xff]
    %v740 = vld [vmem:[#allocation9 + $0x7e0] sm:$0xff]
    %v741 = vld [vmem:[#allocation9 + $0x7e8] sm:$0xff]
    %v742 = vld [vmem:[#allocation9 + $0x7f0] sm:$0xff]
    %v743 = vld [vmem:[#allocation9 + $0x7f8] sm:$0xff]
    %v744 = vld [vmem:[%s4] sm:$0xf]
    %v746 = vlaneseq
    %v747 = vshrl.u32 %v746, 7
    %v748 = vsub.s32 0, %v747
    %v749 = vrot.slane %v744, %v748
    %v750 = vlaneseq
    %v751 = vshrl.u32 %v750, 7
    %v752 = vsub.s32 1, %v751
    %v753 = vrot.slane %v744, %v752
    %v754 = vlaneseq
    %v755 = vshrl.u32 %v754, 7
    %v756 = vsub.s32 2, %v755
    %v757 = vrot.slane %v744, %v756
    %v758 = vlaneseq
    %v759 = vshrl.u32 %v758, 7
    %v760 = vsub.s32 3, %v759
    %v761 = vrot.slane %v744, %v760
    %v1022 = vunpack.c.l.b16 %v488
    %v1023 = vunpack.c.h.b16 %v488
    %v1024 = vunpack.c.l.b16 %v489
    %v1025 = vunpack.c.h.b16 %v489
    %v1026 = vunpack.c.l.b16 %v490
    %v1027 = vunpack.c.h.b16 %v490
    %v1028 = vunpack.c.l.b16 %v491
    %v1029 = vunpack.c.h.b16 %v491
    %v1030 = vunpack.c.l.b16 %v492
    %v1031 = vunpack.c.h.b16 %v492
    %v1032 = vunpack.c.l.b16 %v493
    %v1033 = vunpack.c.h.b16 %v493
    %v1034 = vunpack.c.l.b16 %v494
    %v1035 = vunpack.c.h.b16 %v494
    %v1036 = vunpack.c.l.b16 %v495
    %v1037 = vunpack.c.h.b16 %v495
    %v1038 = vunpack.c.l.b16 %v496
    %v1039 = vunpack.c.h.b16 %v496
    %v1040 = vunpack.c.l.b16 %v497
    %v1041 = vunpack.c.h.b16 %v497
    %v1042 = vunpack.c.l.b16 %v498
    %v1043 = vunpack.c.h.b16 %v498
    %v1044 = vunpack.c.l.b16 %v499
    %v1045 = vunpack.c.h.b16 %v499
    %v1046 = vunpack.c.l.b16 %v500
    %v1047 = vunpack.c.h.b16 %v500
    %v1048 = vunpack.c.l.b16 %v501
    %v1049 = vunpack.c.h.b16 %v501
    %v1050 = vunpack.c.l.b16 %v502
    %v1051 = vunpack.c.h.b16 %v502
    %v1052 = vunpack.c.l.b16 %v503
    %v1053 = vunpack.c.h.b16 %v503
    %v1054 = vunpack.c.l.b16 %v504
    %v1055 = vunpack.c.h.b16 %v504
    %v1056 = vunpack.c.l.b16 %v505
    %v1057 = vunpack.c.h.b16 %v505
    %v1058 = vunpack.c.l.b16 %v506
    %v1059 = vunpack.c.h.b16 %v506
    %v1060 = vunpack.c.l.b16 %v507
    %v1061 = vunpack.c.h.b16 %v507
    %v1062 = vunpack.c.l.b16 %v508
    %v1063 = vunpack.c.h.b16 %v508
    %v1064 = vunpack.c.l.b16 %v509
    %v1065 = vunpack.c.h.b16 %v509
    %v1066 = vunpack.c.l.b16 %v510
    %v1067 = vunpack.c.h.b16 %v510
    %v1068 = vunpack.c.l.b16 %v511
    %v1069 = vunpack.c.h.b16 %v511
    %v1070 = vunpack.c.l.b16 %v512
    %v1071 = vunpack.c.h.b16 %v512
    %v1072 = vunpack.c.l.b16 %v513
    %v1073 = vunpack.c.h.b16 %v513
    %v1074 = vunpack.c.l.b16 %v514
    %v1075 = vunpack.c.h.b16 %v514
    %v1076 = vunpack.c.l.b16 %v515
    %v1077 = vunpack.c.h.b16 %v515
    %v1078 = vunpack.c.l.b16 %v516
    %v1079 = vunpack.c.h.b16 %v516
    %v1080 = vunpack.c.l.b16 %v517
    %v1081 = vunpack.c.h.b16 %v517
    %v1082 = vunpack.c.l.b16 %v518
    %v1083 = vunpack.c.h.b16 %v518
    %v1084 = vunpack.c.l.b16 %v519
    %v1085 = vunpack.c.h.b16 %v519
    %v1086 = vunpack.c.l.b16 %v520
    %v1087 = vunpack.c.h.b16 %v520
    %v1088 = vunpack.c.l.b16 %v521
    %v1089 = vunpack.c.h.b16 %v521
    %v1090 = vunpack.c.l.b16 %v522
    %v1091 = vunpack.c.h.b16 %v522
    %v1092 = vunpack.c.l.b16 %v523
    %v1093 = vunpack.c.h.b16 %v523
    %v1094 = vunpack.c.l.b16 %v524
    %v1095 = vunpack.c.h.b16 %v524
    %v1096 = vunpack.c.l.b16 %v525
    %v1097 = vunpack.c.h.b16 %v525
    %v1098 = vunpack.c.l.b16 %v526
    %v1099 = vunpack.c.h.b16 %v526
    %v1100 = vunpack.c.l.b16 %v527
    %v1101 = vunpack.c.h.b16 %v527
    %v1102 = vunpack.c.l.b16 %v528
    %v1103 = vunpack.c.h.b16 %v528
    %v1104 = vunpack.c.l.b16 %v529
    %v1105 = vunpack.c.h.b16 %v529
    %v1106 = vunpack.c.l.b16 %v530
    %v1107 = vunpack.c.h.b16 %v530
    %v1108 = vunpack.c.l.b16 %v531
    %v1109 = vunpack.c.h.b16 %v531
    %v1110 = vunpack.c.l.b16 %v532
    %v1111 = vunpack.c.h.b16 %v532
    %v1112 = vunpack.c.l.b16 %v533
    %v1113 = vunpack.c.h.b16 %v533
    %v1114 = vunpack.c.l.b16 %v534
    %v1115 = vunpack.c.h.b16 %v534
    %v1116 = vunpack.c.l.b16 %v535
    %v1117 = vunpack.c.h.b16 %v535
    %v1118 = vunpack.c.l.b16 %v536
    %v1119 = vunpack.c.h.b16 %v536
    %v1120 = vunpack.c.l.b16 %v537
    %v1121 = vunpack.c.h.b16 %v537
    %v1122 = vunpack.c.l.b16 %v538
    %v1123 = vunpack.c.h.b16 %v538
    %v1124 = vunpack.c.l.b16 %v539
    %v1125 = vunpack.c.h.b16 %v539
    %v1126 = vunpack.c.l.b16 %v540
    %v1127 = vunpack.c.h.b16 %v540
    %v1128 = vunpack.c.l.b16 %v541
    %v1129 = vunpack.c.h.b16 %v541
    %v1130 = vunpack.c.l.b16 %v542
    %v1131 = vunpack.c.h.b16 %v542
    %v1132 = vunpack.c.l.b16 %v543
    %v1133 = vunpack.c.h.b16 %v543
    %v1134 = vunpack.c.l.b16 %v544
    %v1135 = vunpack.c.h.b16 %v544
    %v1136 = vunpack.c.l.b16 %v545
    %v1137 = vunpack.c.h.b16 %v545
    %v1138 = vunpack.c.l.b16 %v546
    %v1139 = vunpack.c.h.b16 %v546
    %v1140 = vunpack.c.l.b16 %v547
    %v1141 = vunpack.c.h.b16 %v547
    %v1142 = vunpack.c.l.b16 %v548
    %v1143 = vunpack.c.h.b16 %v548
    %v1144 = vunpack.c.l.b16 %v549
    %v1145 = vunpack.c.h.b16 %v549
    %v1146 = vunpack.c.l.b16 %v550
    %v1147 = vunpack.c.h.b16 %v550
    %v1148 = vunpack.c.l.b16 %v551
    %v1149 = vunpack.c.h.b16 %v551
    %v1150 = vunpack.c.l.b16 %v552
    %v1151 = vunpack.c.h.b16 %v552
    %v1152 = vunpack.c.l.b16 %v553
    %v1153 = vunpack.c.h.b16 %v553
    %v1154 = vunpack.c.l.b16 %v554
    %v1155 = vunpack.c.h.b16 %v554
    %v1156 = vunpack.c.l.b16 %v555
    %v1157 = vunpack.c.h.b16 %v555
    %v1158 = vunpack.c.l.b16 %v556
    %v1159 = vunpack.c.h.b16 %v556
    %v1160 = vunpack.c.l.b16 %v557
    %v1161 = vunpack.c.h.b16 %v557
    %v1162 = vunpack.c.l.b16 %v558
    %v1163 = vunpack.c.h.b16 %v558
    %v1164 = vunpack.c.l.b16 %v559
    %v1165 = vunpack.c.h.b16 %v559
    %v1166 = vunpack.c.l.b16 %v560
    %v1167 = vunpack.c.h.b16 %v560
    %v1168 = vunpack.c.l.b16 %v561
    %v1169 = vunpack.c.h.b16 %v561
    %v1170 = vunpack.c.l.b16 %v562
    %v1171 = vunpack.c.h.b16 %v562
    %v1172 = vunpack.c.l.b16 %v563
    %v1173 = vunpack.c.h.b16 %v563
    %v1174 = vunpack.c.l.b16 %v564
    %v1175 = vunpack.c.h.b16 %v564
    %v1176 = vunpack.c.l.b16 %v565
    %v1177 = vunpack.c.h.b16 %v565
    %v1178 = vunpack.c.l.b16 %v566
    %v1179 = vunpack.c.h.b16 %v566
    %v1180 = vunpack.c.l.b16 %v567
    %v1181 = vunpack.c.h.b16 %v567
    %v1182 = vunpack.c.l.b16 %v568
    %v1183 = vunpack.c.h.b16 %v568
    %v1184 = vunpack.c.l.b16 %v569
    %v1185 = vunpack.c.h.b16 %v569
    %v1186 = vunpack.c.l.b16 %v570
    %v1187 = vunpack.c.h.b16 %v570
    %v1188 = vunpack.c.l.b16 %v571
    %v1189 = vunpack.c.h.b16 %v571
    %v1190 = vunpack.c.l.b16 %v572
    %v1191 = vunpack.c.h.b16 %v572
    %v1192 = vunpack.c.l.b16 %v573
    %v1193 = vunpack.c.h.b16 %v573
    %v1194 = vunpack.c.l.b16 %v574
    %v1195 = vunpack.c.h.b16 %v574
    %v1196 = vunpack.c.l.b16 %v575
    %v1197 = vunpack.c.h.b16 %v575
    %v1198 = vunpack.c.l.b16 %v576
    %v1199 = vunpack.c.h.b16 %v576
    %v1200 = vunpack.c.l.b16 %v577
    %v1201 = vunpack.c.h.b16 %v577
    %v1202 = vunpack.c.l.b16 %v578
    %v1203 = vunpack.c.h.b16 %v578
    %v1204 = vunpack.c.l.b16 %v579
    %v1205 = vunpack.c.h.b16 %v579
    %v1206 = vunpack.c.l.b16 %v580
    %v1207 = vunpack.c.h.b16 %v580
    %v1208 = vunpack.c.l.b16 %v581
    %v1209 = vunpack.c.h.b16 %v581
    %v1210 = vunpack.c.l.b16 %v582
    %v1211 = vunpack.c.h.b16 %v582
    %v1212 = vunpack.c.l.b16 %v583
    %v1213 = vunpack.c.h.b16 %v583
    %v1214 = vunpack.c.l.b16 %v584
    %v1215 = vunpack.c.h.b16 %v584
    %v1216 = vunpack.c.l.b16 %v585
    %v1217 = vunpack.c.h.b16 %v585
    %v1218 = vunpack.c.l.b16 %v586
    %v1219 = vunpack.c.h.b16 %v586
    %v1220 = vunpack.c.l.b16 %v587
    %v1221 = vunpack.c.h.b16 %v587
    %v1222 = vunpack.c.l.b16 %v588
    %v1223 = vunpack.c.h.b16 %v588
    %v1224 = vunpack.c.l.b16 %v589
    %v1225 = vunpack.c.h.b16 %v589
    %v1226 = vunpack.c.l.b16 %v590
    %v1227 = vunpack.c.h.b16 %v590
    %v1228 = vunpack.c.l.b16 %v591
    %v1229 = vunpack.c.h.b16 %v591
    %v1230 = vunpack.c.l.b16 %v592
    %v1231 = vunpack.c.h.b16 %v592
    %v1232 = vunpack.c.l.b16 %v593
    %v1233 = vunpack.c.h.b16 %v593
    %v1234 = vunpack.c.l.b16 %v594
    %v1235 = vunpack.c.h.b16 %v594
    %v1236 = vunpack.c.l.b16 %v595
    %v1237 = vunpack.c.h.b16 %v595
    %v1238 = vunpack.c.l.b16 %v596
    %v1239 = vunpack.c.h.b16 %v596
    %v1240 = vunpack.c.l.b16 %v597
    %v1241 = vunpack.c.h.b16 %v597
    %v1242 = vunpack.c.l.b16 %v598
    %v1243 = vunpack.c.h.b16 %v598
    %v1244 = vunpack.c.l.b16 %v599
    %v1245 = vunpack.c.h.b16 %v599
    %v1246 = vunpack.c.l.b16 %v600
    %v1247 = vunpack.c.h.b16 %v600
    %v1248 = vunpack.c.l.b16 %v601
    %v1249 = vunpack.c.h.b16 %v601
    %v1250 = vunpack.c.l.b16 %v602
    %v1251 = vunpack.c.h.b16 %v602
    %v1252 = vunpack.c.l.b16 %v603
    %v1253 = vunpack.c.h.b16 %v603
    %v1254 = vunpack.c.l.b16 %v604
    %v1255 = vunpack.c.h.b16 %v604
    %v1256 = vunpack.c.l.b16 %v605
    %v1257 = vunpack.c.h.b16 %v605
    %v1258 = vunpack.c.l.b16 %v606
    %v1259 = vunpack.c.h.b16 %v606
    %v1260 = vunpack.c.l.b16 %v607
    %v1261 = vunpack.c.h.b16 %v607
    %v1262 = vunpack.c.l.b16 %v608
    %v1263 = vunpack.c.h.b16 %v608
    %v1264 = vunpack.c.l.b16 %v609
    %v1265 = vunpack.c.h.b16 %v609
    %v1266 = vunpack.c.l.b16 %v610
    %v1267 = vunpack.c.h.b16 %v610
    %v1268 = vunpack.c.l.b16 %v611
    %v1269 = vunpack.c.h.b16 %v611
    %v1270 = vunpack.c.l.b16 %v612
    %v1271 = vunpack.c.h.b16 %v612
    %v1272 = vunpack.c.l.b16 %v613
    %v1273 = vunpack.c.h.b16 %v613
    %v1274 = vunpack.c.l.b16 %v614
    %v1275 = vunpack.c.h.b16 %v614
    %v1276 = vunpack.c.l.b16 %v615
    %v1277 = vunpack.c.h.b16 %v615
    %v1278 = vunpack.c.l.b16 %v616
    %v1279 = vunpack.c.h.b16 %v616
    %v1280 = vunpack.c.l.b16 %v617
    %v1281 = vunpack.c.h.b16 %v617
    %v1282 = vunpack.c.l.b16 %v618
    %v1283 = vunpack.c.h.b16 %v618
    %v1284 = vunpack.c.l.b16 %v619
    %v1285 = vunpack.c.h.b16 %v619
    %v1286 = vunpack.c.l.b16 %v620
    %v1287 = vunpack.c.h.b16 %v620
    %v1288 = vunpack.c.l.b16 %v621
    %v1289 = vunpack.c.h.b16 %v621
    %v1290 = vunpack.c.l.b16 %v622
    %v1291 = vunpack.c.h.b16 %v622
    %v1292 = vunpack.c.l.b16 %v623
    %v1293 = vunpack.c.h.b16 %v623
    %v1294 = vunpack.c.l.b16 %v624
    %v1295 = vunpack.c.h.b16 %v624
    %v1296 = vunpack.c.l.b16 %v625
    %v1297 = vunpack.c.h.b16 %v625
    %v1298 = vunpack.c.l.b16 %v626
    %v1299 = vunpack.c.h.b16 %v626
    %v1300 = vunpack.c.l.b16 %v627
    %v1301 = vunpack.c.h.b16 %v627
    %v1302 = vunpack.c.l.b16 %v628
    %v1303 = vunpack.c.h.b16 %v628
    %v1304 = vunpack.c.l.b16 %v629
    %v1305 = vunpack.c.h.b16 %v629
    %v1306 = vunpack.c.l.b16 %v630
    %v1307 = vunpack.c.h.b16 %v630
    %v1308 = vunpack.c.l.b16 %v631
    %v1309 = vunpack.c.h.b16 %v631
    %v1310 = vunpack.c.l.b16 %v632
    %v1311 = vunpack.c.h.b16 %v632
    %v1312 = vunpack.c.l.b16 %v633
    %v1313 = vunpack.c.h.b16 %v633
    %v1314 = vunpack.c.l.b16 %v634
    %v1315 = vunpack.c.h.b16 %v634
    %v1316 = vunpack.c.l.b16 %v635
    %v1317 = vunpack.c.h.b16 %v635
    %v1318 = vunpack.c.l.b16 %v636
    %v1319 = vunpack.c.h.b16 %v636
    %v1320 = vunpack.c.l.b16 %v637
    %v1321 = vunpack.c.h.b16 %v637
    %v1322 = vunpack.c.l.b16 %v638
    %v1323 = vunpack.c.h.b16 %v638
    %v1324 = vunpack.c.l.b16 %v639
    %v1325 = vunpack.c.h.b16 %v639
    %v1326 = vunpack.c.l.b16 %v640
    %v1327 = vunpack.c.h.b16 %v640
    %v1328 = vunpack.c.l.b16 %v641
    %v1329 = vunpack.c.h.b16 %v641
    %v1330 = vunpack.c.l.b16 %v642
    %v1331 = vunpack.c.h.b16 %v642
    %v1332 = vunpack.c.l.b16 %v643
    %v1333 = vunpack.c.h.b16 %v643
    %v1334 = vunpack.c.l.b16 %v644
    %v1335 = vunpack.c.h.b16 %v644
    %v1336 = vunpack.c.l.b16 %v645
    %v1337 = vunpack.c.h.b16 %v645
    %v1338 = vunpack.c.l.b16 %v646
    %v1339 = vunpack.c.h.b16 %v646
    %v1340 = vunpack.c.l.b16 %v647
    %v1341 = vunpack.c.h.b16 %v647
    %v1342 = vunpack.c.l.b16 %v648
    %v1343 = vunpack.c.h.b16 %v648
    %v1344 = vunpack.c.l.b16 %v649
    %v1345 = vunpack.c.h.b16 %v649
    %v1346 = vunpack.c.l.b16 %v650
    %v1347 = vunpack.c.h.b16 %v650
    %v1348 = vunpack.c.l.b16 %v651
    %v1349 = vunpack.c.h.b16 %v651
    %v1350 = vunpack.c.l.b16 %v652
    %v1351 = vunpack.c.h.b16 %v652
    %v1352 = vunpack.c.l.b16 %v653
    %v1353 = vunpack.c.h.b16 %v653
    %v1354 = vunpack.c.l.b16 %v654
    %v1355 = vunpack.c.h.b16 %v654
    %v1356 = vunpack.c.l.b16 %v655
    %v1357 = vunpack.c.h.b16 %v655
    %v1358 = vunpack.c.l.b16 %v656
    %v1359 = vunpack.c.h.b16 %v656
    %v1360 = vunpack.c.l.b16 %v657
    %v1361 = vunpack.c.h.b16 %v657
    %v1362 = vunpack.c.l.b16 %v658
    %v1363 = vunpack.c.h.b16 %v658
    %v1364 = vunpack.c.l.b16 %v659
    %v1365 = vunpack.c.h.b16 %v659
    %v1366 = vunpack.c.l.b16 %v660
    %v1367 = vunpack.c.h.b16 %v660
    %v1368 = vunpack.c.l.b16 %v661
    %v1369 = vunpack.c.h.b16 %v661
    %v1370 = vunpack.c.l.b16 %v662
    %v1371 = vunpack.c.h.b16 %v662
    %v1372 = vunpack.c.l.b16 %v663
    %v1373 = vunpack.c.h.b16 %v663
    %v1374 = vunpack.c.l.b16 %v664
    %v1375 = vunpack.c.h.b16 %v664
    %v1376 = vunpack.c.l.b16 %v665
    %v1377 = vunpack.c.h.b16 %v665
    %v1378 = vunpack.c.l.b16 %v666
    %v1379 = vunpack.c.h.b16 %v666
    %v1380 = vunpack.c.l.b16 %v667
    %v1381 = vunpack.c.h.b16 %v667
    %v1382 = vunpack.c.l.b16 %v668
    %v1383 = vunpack.c.h.b16 %v668
    %v1384 = vunpack.c.l.b16 %v669
    %v1385 = vunpack.c.h.b16 %v669
    %v1386 = vunpack.c.l.b16 %v670
    %v1387 = vunpack.c.h.b16 %v670
    %v1388 = vunpack.c.l.b16 %v671
    %v1389 = vunpack.c.h.b16 %v671
    %v1390 = vunpack.c.l.b16 %v672
    %v1391 = vunpack.c.h.b16 %v672
    %v1392 = vunpack.c.l.b16 %v673
    %v1393 = vunpack.c.h.b16 %v673
    %v1394 = vunpack.c.l.b16 %v674
    %v1395 = vunpack.c.h.b16 %v674
    %v1396 = vunpack.c.l.b16 %v675
    %v1397 = vunpack.c.h.b16 %v675
    %v1398 = vunpack.c.l.b16 %v676
    %v1399 = vunpack.c.h.b16 %v676
    %v1400 = vunpack.c.l.b16 %v677
    %v1401 = vunpack.c.h.b16 %v677
    %v1402 = vunpack.c.l.b16 %v678
    %v1403 = vunpack.c.h.b16 %v678
    %v1404 = vunpack.c.l.b16 %v679
    %v1405 = vunpack.c.h.b16 %v679
    %v1406 = vunpack.c.l.b16 %v680
    %v1407 = vunpack.c.h.b16 %v680
    %v1408 = vunpack.c.l.b16 %v681
    %v1409 = vunpack.c.h.b16 %v681
    %v1410 = vunpack.c.l.b16 %v682
    %v1411 = vunpack.c.h.b16 %v682
    %v1412 = vunpack.c.l.b16 %v683
    %v1413 = vunpack.c.h.b16 %v683
    %v1414 = vunpack.c.l.b16 %v684
    %v1415 = vunpack.c.h.b16 %v684
    %v1416 = vunpack.c.l.b16 %v685
    %v1417 = vunpack.c.h.b16 %v685
    %v1418 = vunpack.c.l.b16 %v686
    %v1419 = vunpack.c.h.b16 %v686
    %v1420 = vunpack.c.l.b16 %v687
    %v1421 = vunpack.c.h.b16 %v687
    %v1422 = vunpack.c.l.b16 %v688
    %v1423 = vunpack.c.h.b16 %v688
    %v1424 = vunpack.c.l.b16 %v689
    %v1425 = vunpack.c.h.b16 %v689
    %v1426 = vunpack.c.l.b16 %v690
    %v1427 = vunpack.c.h.b16 %v690
    %v1428 = vunpack.c.l.b16 %v691
    %v1429 = vunpack.c.h.b16 %v691
    %v1430 = vunpack.c.l.b16 %v692
    %v1431 = vunpack.c.h.b16 %v692
    %v1432 = vunpack.c.l.b16 %v693
    %v1433 = vunpack.c.h.b16 %v693
    %v1434 = vunpack.c.l.b16 %v694
    %v1435 = vunpack.c.h.b16 %v694
    %v1436 = vunpack.c.l.b16 %v695
    %v1437 = vunpack.c.h.b16 %v695
    %v1438 = vunpack.c.l.b16 %v696
    %v1439 = vunpack.c.h.b16 %v696
    %v1440 = vunpack.c.l.b16 %v697
    %v1441 = vunpack.c.h.b16 %v697
    %v1442 = vunpack.c.l.b16 %v698
    %v1443 = vunpack.c.h.b16 %v698
    %v1444 = vunpack.c.l.b16 %v699
    %v1445 = vunpack.c.h.b16 %v699
    %v1446 = vunpack.c.l.b16 %v700
    %v1447 = vunpack.c.h.b16 %v700
    %v1448 = vunpack.c.l.b16 %v701
    %v1449 = vunpack.c.h.b16 %v701
    %v1450 = vunpack.c.l.b16 %v702
    %v1451 = vunpack.c.h.b16 %v702
    %v1452 = vunpack.c.l.b16 %v703
    %v1453 = vunpack.c.h.b16 %v703
    %v1454 = vunpack.c.l.b16 %v704
    %v1455 = vunpack.c.h.b16 %v704
    %v1456 = vunpack.c.l.b16 %v705
    %v1457 = vunpack.c.h.b16 %v705
    %v1458 = vunpack.c.l.b16 %v706
    %v1459 = vunpack.c.h.b16 %v706
    %v1460 = vunpack.c.l.b16 %v707
    %v1461 = vunpack.c.h.b16 %v707
    %v1462 = vunpack.c.l.b16 %v708
    %v1463 = vunpack.c.h.b16 %v708
    %v1464 = vunpack.c.l.b16 %v709
    %v1465 = vunpack.c.h.b16 %v709
    %v1466 = vunpack.c.l.b16 %v710
    %v1467 = vunpack.c.h.b16 %v710
    %v1468 = vunpack.c.l.b16 %v711
    %v1469 = vunpack.c.h.b16 %v711
    %v1470 = vunpack.c.l.b16 %v712
    %v1471 = vunpack.c.h.b16 %v712
    %v1472 = vunpack.c.l.b16 %v713
    %v1473 = vunpack.c.h.b16 %v713
    %v1474 = vunpack.c.l.b16 %v714
    %v1475 = vunpack.c.h.b16 %v714
    %v1476 = vunpack.c.l.b16 %v715
    %v1477 = vunpack.c.h.b16 %v715
    %v1478 = vunpack.c.l.b16 %v716
    %v1479 = vunpack.c.h.b16 %v716
    %v1480 = vunpack.c.l.b16 %v717
    %v1481 = vunpack.c.h.b16 %v717
    %v1482 = vunpack.c.l.b16 %v718
    %v1483 = vunpack.c.h.b16 %v718
    %v1484 = vunpack.c.l.b16 %v719
    %v1485 = vunpack.c.h.b16 %v719
    %v1486 = vunpack.c.l.b16 %v720
    %v1487 = vunpack.c.h.b16 %v720
    %v1488 = vunpack.c.l.b16 %v721
    %v1489 = vunpack.c.h.b16 %v721
    %v1490 = vunpack.c.l.b16 %v722
    %v1491 = vunpack.c.h.b16 %v722
    %v1492 = vunpack.c.l.b16 %v723
    %v1493 = vunpack.c.h.b16 %v723
    %v1494 = vunpack.c.l.b16 %v724
    %v1495 = vunpack.c.h.b16 %v724
    %v1496 = vunpack.c.l.b16 %v725
    %v1497 = vunpack.c.h.b16 %v725
    %v1498 = vunpack.c.l.b16 %v726
    %v1499 = vunpack.c.h.b16 %v726
    %v1500 = vunpack.c.l.b16 %v727
    %v1501 = vunpack.c.h.b16 %v727
    %v1502 = vunpack.c.l.b16 %v728
    %v1503 = vunpack.c.h.b16 %v728
    %v1504 = vunpack.c.l.b16 %v729
    %v1505 = vunpack.c.h.b16 %v729
    %v1506 = vunpack.c.l.b16 %v730
    %v1507 = vunpack.c.h.b16 %v730
    %v1508 = vunpack.c.l.b16 %v731
    %v1509 = vunpack.c.h.b16 %v731
    %v1510 = vunpack.c.l.b16 %v732
    %v1511 = vunpack.c.h.b16 %v732
    %v1512 = vunpack.c.l.b16 %v733
    %v1513 = vunpack.c.h.b16 %v733
    %v1514 = vunpack.c.l.b16 %v734
    %v1515 = vunpack.c.h.b16 %v734
    %v1516 = vunpack.c.l.b16 %v735
    %v1517 = vunpack.c.h.b16 %v735
    %v1518 = vunpack.c.l.b16 %v736
    %v1519 = vunpack.c.h.b16 %v736
    %v1520 = vunpack.c.l.b16 %v737
    %v1521 = vunpack.c.h.b16 %v737
    %v1522 = vunpack.c.l.b16 %v738
    %v1523 = vunpack.c.h.b16 %v738
    %v1524 = vunpack.c.l.b16 %v739
    %v1525 = vunpack.c.h.b16 %v739
    %v1526 = vunpack.c.l.b16 %v740
    %v1527 = vunpack.c.h.b16 %v740
    %v1528 = vunpack.c.l.b16 %v741
    %v1529 = vunpack.c.h.b16 %v741
    %v1530 = vunpack.c.l.b16 %v742
    %v1531 = vunpack.c.h.b16 %v742
    %v1532 = vunpack.c.l.b16 %v743
    %v1533 = vunpack.c.h.b16 %v743
    %v1534 = vpack.c.b16 %v1026, %v1022
    %v1535 = vpack.c.b16 %v1027, %v1023
    %v1536 = vpack.c.b16 %v1028, %v1024
    %v1537 = vpack.c.b16 %v1029, %v1025
    %v1538 = vpack.c.b16 %v1034, %v1030
    %v1539 = vpack.c.b16 %v1035, %v1031
    %v1540 = vpack.c.b16 %v1036, %v1032
    %v1541 = vpack.c.b16 %v1037, %v1033
    %v1542 = vpack.c.b16 %v1042, %v1038
    %v1543 = vpack.c.b16 %v1043, %v1039
    %v1544 = vpack.c.b16 %v1044, %v1040
    %v1545 = vpack.c.b16 %v1045, %v1041
    %v1546 = vpack.c.b16 %v1050, %v1046
    %v1547 = vpack.c.b16 %v1051, %v1047
    %v1548 = vpack.c.b16 %v1052, %v1048
    %v1549 = vpack.c.b16 %v1053, %v1049
    %v1550 = vpack.c.b16 %v1058, %v1054
    %v1551 = vpack.c.b16 %v1059, %v1055
    %v1552 = vpack.c.b16 %v1060, %v1056
    %v1553 = vpack.c.b16 %v1061, %v1057
    %v1554 = vpack.c.b16 %v1066, %v1062
    %v1555 = vpack.c.b16 %v1067, %v1063
    %v1556 = vpack.c.b16 %v1068, %v1064
    %v1557 = vpack.c.b16 %v1069, %v1065
    %v1558 = vpack.c.b16 %v1074, %v1070
    %v1559 = vpack.c.b16 %v1075, %v1071
    %v1560 = vpack.c.b16 %v1076, %v1072
    %v1561 = vpack.c.b16 %v1077, %v1073
    %v1562 = vpack.c.b16 %v1082, %v1078
    %v1563 = vpack.c.b16 %v1083, %v1079
    %v1564 = vpack.c.b16 %v1084, %v1080
    %v1565 = vpack.c.b16 %v1085, %v1081
    %v1566 = vpack.c.b16 %v1090, %v1086
    %v1567 = vpack.c.b16 %v1091, %v1087
    %v1568 = vpack.c.b16 %v1092, %v1088
    %v1569 = vpack.c.b16 %v1093, %v1089
    %v1570 = vpack.c.b16 %v1098, %v1094
    %v1571 = vpack.c.b16 %v1099, %v1095
    %v1572 = vpack.c.b16 %v1100, %v1096
    %v1573 = vpack.c.b16 %v1101, %v1097
    %v1574 = vpack.c.b16 %v1106, %v1102
    %v1575 = vpack.c.b16 %v1107, %v1103
    %v1576 = vpack.c.b16 %v1108, %v1104
    %v1577 = vpack.c.b16 %v1109, %v1105
    %v1578 = vpack.c.b16 %v1114, %v1110
    %v1579 = vpack.c.b16 %v1115, %v1111
    %v1580 = vpack.c.b16 %v1116, %v1112
    %v1581 = vpack.c.b16 %v1117, %v1113
    %v1582 = vpack.c.b16 %v1122, %v1118
    %v1583 = vpack.c.b16 %v1123, %v1119
    %v1584 = vpack.c.b16 %v1124, %v1120
    %v1585 = vpack.c.b16 %v1125, %v1121
    %v1586 = vpack.c.b16 %v1130, %v1126
    %v1587 = vpack.c.b16 %v1131, %v1127
    %v1588 = vpack.c.b16 %v1132, %v1128
    %v1589 = vpack.c.b16 %v1133, %v1129
    %v1590 = vpack.c.b16 %v1138, %v1134
    %v1591 = vpack.c.b16 %v1139, %v1135
    %v1592 = vpack.c.b16 %v1140, %v1136
    %v1593 = vpack.c.b16 %v1141, %v1137
    %v1594 = vpack.c.b16 %v1146, %v1142
    %v1595 = vpack.c.b16 %v1147, %v1143
    %v1596 = vpack.c.b16 %v1148, %v1144
    %v1597 = vpack.c.b16 %v1149, %v1145
    %v1598 = vpack.c.b16 %v1154, %v1150
    %v1599 = vpack.c.b16 %v1155, %v1151
    %v1600 = vpack.c.b16 %v1156, %v1152
    %v1601 = vpack.c.b16 %v1157, %v1153
    %v1602 = vpack.c.b16 %v1162, %v1158
    %v1603 = vpack.c.b16 %v1163, %v1159
    %v1604 = vpack.c.b16 %v1164, %v1160
    %v1605 = vpack.c.b16 %v1165, %v1161
    %v1606 = vpack.c.b16 %v1170, %v1166
    %v1607 = vpack.c.b16 %v1171, %v1167
    %v1608 = vpack.c.b16 %v1172, %v1168
    %v1609 = vpack.c.b16 %v1173, %v1169
    %v1610 = vpack.c.b16 %v1178, %v1174
    %v1611 = vpack.c.b16 %v1179, %v1175
    %v1612 = vpack.c.b16 %v1180, %v1176
    %v1613 = vpack.c.b16 %v1181, %v1177
    %v1614 = vpack.c.b16 %v1186, %v1182
    %v1615 = vpack.c.b16 %v1187, %v1183
    %v1616 = vpack.c.b16 %v1188, %v1184
    %v1617 = vpack.c.b16 %v1189, %v1185
    %v1618 = vpack.c.b16 %v1194, %v1190
    %v1619 = vpack.c.b16 %v1195, %v1191
    %v1620 = vpack.c.b16 %v1196, %v1192
    %v1621 = vpack.c.b16 %v1197, %v1193
    %v1622 = vpack.c.b16 %v1202, %v1198
    %v1623 = vpack.c.b16 %v1203, %v1199
    %v1624 = vpack.c.b16 %v1204, %v1200
    %v1625 = vpack.c.b16 %v1205, %v1201
    %v1626 = vpack.c.b16 %v1210, %v1206
    %v1627 = vpack.c.b16 %v1211, %v1207
    %v1628 = vpack.c.b16 %v1212, %v1208
    %v1629 = vpack.c.b16 %v1213, %v1209
    %v1630 = vpack.c.b16 %v1218, %v1214
    %v1631 = vpack.c.b16 %v1219, %v1215
    %v1632 = vpack.c.b16 %v1220, %v1216
    %v1633 = vpack.c.b16 %v1221, %v1217
    %v1634 = vpack.c.b16 %v1226, %v1222
    %v1635 = vpack.c.b16 %v1227, %v1223
    %v1636 = vpack.c.b16 %v1228, %v1224
    %v1637 = vpack.c.b16 %v1229, %v1225
    %v1638 = vpack.c.b16 %v1234, %v1230
    %v1639 = vpack.c.b16 %v1235, %v1231
    %v1640 = vpack.c.b16 %v1236, %v1232
    %v1641 = vpack.c.b16 %v1237, %v1233
    %v1642 = vpack.c.b16 %v1242, %v1238
    %v1643 = vpack.c.b16 %v1243, %v1239
    %v1644 = vpack.c.b16 %v1244, %v1240
    %v1645 = vpack.c.b16 %v1245, %v1241
    %v1646 = vpack.c.b16 %v1250, %v1246
    %v1647 = vpack.c.b16 %v1251, %v1247
    %v1648 = vpack.c.b16 %v1252, %v1248
    %v1649 = vpack.c.b16 %v1253, %v1249
    %v1650 = vpack.c.b16 %v1258, %v1254
    %v1651 = vpack.c.b16 %v1259, %v1255
    %v1652 = vpack.c.b16 %v1260, %v1256
    %v1653 = vpack.c.b16 %v1261, %v1257
    %v1654 = vpack.c.b16 %v1266, %v1262
    %v1655 = vpack.c.b16 %v1267, %v1263
    %v1656 = vpack.c.b16 %v1268, %v1264
    %v1657 = vpack.c.b16 %v1269, %v1265
    %v1658 = vpack.c.b16 %v1274, %v1270
    %v1659 = vpack.c.b16 %v1275, %v1271
    %v1660 = vpack.c.b16 %v1276, %v1272
    %v1661 = vpack.c.b16 %v1277, %v1273
    %v1662 = vpack.c.b16 %v1282, %v1278
    %v1663 = vpack.c.b16 %v1283, %v1279
    %v1664 = vpack.c.b16 %v1284, %v1280
    %v1665 = vpack.c.b16 %v1285, %v1281
    %v1666 = vpack.c.b16 %v1290, %v1286
    %v1667 = vpack.c.b16 %v1291, %v1287
    %v1668 = vpack.c.b16 %v1292, %v1288
    %v1669 = vpack.c.b16 %v1293, %v1289
    %v1670 = vpack.c.b16 %v1298, %v1294
    %v1671 = vpack.c.b16 %v1299, %v1295
    %v1672 = vpack.c.b16 %v1300, %v1296
    %v1673 = vpack.c.b16 %v1301, %v1297
    %v1674 = vpack.c.b16 %v1306, %v1302
    %v1675 = vpack.c.b16 %v1307, %v1303
    %v1676 = vpack.c.b16 %v1308, %v1304
    %v1677 = vpack.c.b16 %v1309, %v1305
    %v1678 = vpack.c.b16 %v1314, %v1310
    %v1679 = vpack.c.b16 %v1315, %v1311
    %v1680 = vpack.c.b16 %v1316, %v1312
    %v1681 = vpack.c.b16 %v1317, %v1313
    %v1682 = vpack.c.b16 %v1322, %v1318
    %v1683 = vpack.c.b16 %v1323, %v1319
    %v1684 = vpack.c.b16 %v1324, %v1320
    %v1685 = vpack.c.b16 %v1325, %v1321
    %v1686 = vpack.c.b16 %v1330, %v1326
    %v1687 = vpack.c.b16 %v1331, %v1327
    %v1688 = vpack.c.b16 %v1332, %v1328
    %v1689 = vpack.c.b16 %v1333, %v1329
    %v1690 = vpack.c.b16 %v1338, %v1334
    %v1691 = vpack.c.b16 %v1339, %v1335
    %v1692 = vpack.c.b16 %v1340, %v1336
    %v1693 = vpack.c.b16 %v1341, %v1337
    %v1694 = vpack.c.b16 %v1346, %v1342
    %v1695 = vpack.c.b16 %v1347, %v1343
    %v1696 = vpack.c.b16 %v1348, %v1344
    %v1697 = vpack.c.b16 %v1349, %v1345
    %v1698 = vpack.c.b16 %v1354, %v1350
    %v1699 = vpack.c.b16 %v1355, %v1351
    %v1700 = vpack.c.b16 %v1356, %v1352
    %v1701 = vpack.c.b16 %v1357, %v1353
    %v1702 = vpack.c.b16 %v1362, %v1358
    %v1703 = vpack.c.b16 %v1363, %v1359
    %v1704 = vpack.c.b16 %v1364, %v1360
    %v1705 = vpack.c.b16 %v1365, %v1361
    %v1706 = vpack.c.b16 %v1370, %v1366
    %v1707 = vpack.c.b16 %v1371, %v1367
    %v1708 = vpack.c.b16 %v1372, %v1368
    %v1709 = vpack.c.b16 %v1373, %v1369
    %v1710 = vpack.c.b16 %v1378, %v1374
    %v1711 = vpack.c.b16 %v1379, %v1375
    %v1712 = vpack.c.b16 %v1380, %v1376
    %v1713 = vpack.c.b16 %v1381, %v1377
    %v1714 = vpack.c.b16 %v1386, %v1382
    %v1715 = vpack.c.b16 %v1387, %v1383
    %v1716 = vpack.c.b16 %v1388, %v1384
    %v1717 = vpack.c.b16 %v1389, %v1385
    %v1718 = vpack.c.b16 %v1394, %v1390
    %v1719 = vpack.c.b16 %v1395, %v1391
    %v1720 = vpack.c.b16 %v1396, %v1392
    %v1721 = vpack.c.b16 %v1397, %v1393
    %v1722 = vpack.c.b16 %v1402, %v1398
    %v1723 = vpack.c.b16 %v1403, %v1399
    %v1724 = vpack.c.b16 %v1404, %v1400
    %v1725 = vpack.c.b16 %v1405, %v1401
    %v1726 = vpack.c.b16 %v1410, %v1406
    %v1727 = vpack.c.b16 %v1411, %v1407
    %v1728 = vpack.c.b16 %v1412, %v1408
    %v1729 = vpack.c.b16 %v1413, %v1409
    %v1730 = vpack.c.b16 %v1418, %v1414
    %v1731 = vpack.c.b16 %v1419, %v1415
    %v1732 = vpack.c.b16 %v1420, %v1416
    %v1733 = vpack.c.b16 %v1421, %v1417
    %v1734 = vpack.c.b16 %v1426, %v1422
    %v1735 = vpack.c.b16 %v1427, %v1423
    %v1736 = vpack.c.b16 %v1428, %v1424
    %v1737 = vpack.c.b16 %v1429, %v1425
    %v1738 = vpack.c.b16 %v1434, %v1430
    %v1739 = vpack.c.b16 %v1435, %v1431
    %v1740 = vpack.c.b16 %v1436, %v1432
    %v1741 = vpack.c.b16 %v1437, %v1433
    %v1742 = vpack.c.b16 %v1442, %v1438
    %v1743 = vpack.c.b16 %v1443, %v1439
    %v1744 = vpack.c.b16 %v1444, %v1440
    %v1745 = vpack.c.b16 %v1445, %v1441
    %v1746 = vpack.c.b16 %v1450, %v1446
    %v1747 = vpack.c.b16 %v1451, %v1447
    %v1748 = vpack.c.b16 %v1452, %v1448
    %v1749 = vpack.c.b16 %v1453, %v1449
    %v1750 = vpack.c.b16 %v1458, %v1454
    %v1751 = vpack.c.b16 %v1459, %v1455
    %v1752 = vpack.c.b16 %v1460, %v1456
    %v1753 = vpack.c.b16 %v1461, %v1457
    %v1754 = vpack.c.b16 %v1466, %v1462
    %v1755 = vpack.c.b16 %v1467, %v1463
    %v1756 = vpack.c.b16 %v1468, %v1464
    %v1757 = vpack.c.b16 %v1469, %v1465
    %v1758 = vpack.c.b16 %v1474, %v1470
    %v1759 = vpack.c.b16 %v1475, %v1471
    %v1760 = vpack.c.b16 %v1476, %v1472
    %v1761 = vpack.c.b16 %v1477, %v1473
    %v1762 = vpack.c.b16 %v1482, %v1478
    %v1763 = vpack.c.b16 %v1483, %v1479
    %v1764 = vpack.c.b16 %v1484, %v1480
    %v1765 = vpack.c.b16 %v1485, %v1481
    %v1766 = vpack.c.b16 %v1490, %v1486
    %v1767 = vpack.c.b16 %v1491, %v1487
    %v1768 = vpack.c.b16 %v1492, %v1488
    %v1769 = vpack.c.b16 %v1493, %v1489
    %v1770 = vpack.c.b16 %v1498, %v1494
    %v1771 = vpack.c.b16 %v1499, %v1495
    %v1772 = vpack.c.b16 %v1500, %v1496
    %v1773 = vpack.c.b16 %v1501, %v1497
    %v1774 = vpack.c.b16 %v1506, %v1502
    %v1775 = vpack.c.b16 %v1507, %v1503
    %v1776 = vpack.c.b16 %v1508, %v1504
    %v1777 = vpack.c.b16 %v1509, %v1505
    %v1778 = vpack.c.b16 %v1514, %v1510
    %v1779 = vpack.c.b16 %v1515, %v1511
    %v1780 = vpack.c.b16 %v1516, %v1512
    %v1781 = vpack.c.b16 %v1517, %v1513
    %v1782 = vpack.c.b16 %v1522, %v1518
    %v1783 = vpack.c.b16 %v1523, %v1519
    %v1784 = vpack.c.b16 %v1524, %v1520
    %v1785 = vpack.c.b16 %v1525, %v1521
    %v1786 = vpack.c.b16 %v1530, %v1526
    %v1787 = vpack.c.b16 %v1531, %v1527
    %v1788 = vpack.c.b16 %v1532, %v1528
    %v1789 = vpack.c.b16 %v1533, %v1529
    %2046 = vmatprep.subr.bf16.mxu0 %v1563
    %2047 = vmatpush1.bf16.msra.mxu0 %v1562
    %2048 = vmatprep.subr.bf16.mxu0 %v1559
    %2049 = vmatpush1.bf16.msra.mxu0 %v1558
    %2050 = vmatprep.subr.bf16.mxu0 %v1555
    %2051 = vmatpush1.bf16.msra.mxu0 %v1554
    %2052 = vmatprep.subr.bf16.mxu0 %v1551
    %2053 = vmatpush1.bf16.msra.mxu0 %v1550
    %2054 = vmatprep.subr.bf16.mxu0 %v1547
    %2055 = vmatpush1.bf16.msra.mxu0 %v1546
    %2056 = vmatprep.subr.bf16.mxu0 %v1543
    %2057 = vmatpush1.bf16.msra.mxu0 %v1542
    %2058 = vmatprep.subr.bf16.mxu0 %v1539
    %2059 = vmatpush1.bf16.msra.mxu0 %v1538
    %2060 = vmatprep.subr.bf16.mxu0 %v1535
    %2061 = vmatpush1.bf16.msra.mxu0 %v1534
    %2062 = vmatprep.subr.bf16.mxu0 %v1595
    %2063 = vmatpush2.bf16.msra.mxu0 %v1594
    %2064 = vmatprep.subr.bf16.mxu0 %v1591
    %2065 = vmatpush2.bf16.msra.mxu0 %v1590
    %2066 = vmatprep.subr.bf16.mxu0 %v1587
    %2067 = vmatpush2.bf16.msra.mxu0 %v1586
    %2068 = vmatprep.subr.bf16.mxu0 %v1583
    %2069 = vmatpush2.bf16.msra.mxu0 %v1582
    %2070 = vmatprep.subr.bf16.mxu0 %v1579
    %2071 = vmatpush2.bf16.msra.mxu0 %v1578
    %2072 = vmatprep.subr.bf16.mxu0 %v1575
    %2073 = vmatpush2.bf16.msra.mxu0 %v1574
    %2074 = vmatprep.subr.bf16.mxu0 %v1571
    %2075 = vmatpush2.bf16.msra.mxu0 %v1570
    %2076 = vmatprep.subr.bf16.mxu0 %v1567
    %2077 = vmatpush2.bf16.msra.mxu0 %v1566
    %2078 = vmatprep.mubr.bf16.mxu0 %v481
    %2079 = vmatmul.mubr.bf16.gmra.mxu0 %v480
    %v2080 = vpop.f32.mrf.mxu0
    %v2081 = vadd.f32 %v749, %v2080
    %v2082 = vpop.f32.mrf.mxu0
    %v2083 = vadd.f32 %v753, %v2082
    %v2084 = vpop.f32.mrf.mxu0
    %v2085 = vpop.f32.mrf.mxu0
    %2086 = vdwg.mxu0
    %2087 = vmatprep.subr.bf16.mxu0 %v1627
    %2088 = vmatpush1.bf16.msra.mxu0 %v1626
    %2089 = vmatprep.subr.bf16.mxu0 %v1623
    %2090 = vmatpush1.bf16.msra.mxu0 %v1622
    %2091 = vmatprep.subr.bf16.mxu0 %v1619
    %2092 = vmatpush1.bf16.msra.mxu0 %v1618
    %2093 = vmatprep.subr.bf16.mxu0 %v1615
    %2094 = vmatpush1.bf16.msra.mxu0 %v1614
    %2095 = vmatprep.subr.bf16.mxu0 %v1611
    %2096 = vmatpush1.bf16.msra.mxu0 %v1610
    %2097 = vmatprep.subr.bf16.mxu0 %v1607
    %2098 = vmatpush1.bf16.msra.mxu0 %v1606
    %2099 = vmatprep.subr.bf16.mxu0 %v1603
    %2100 = vmatpush1.bf16.msra.mxu0 %v1602
    %2101 = vmatprep.subr.bf16.mxu0 %v1599
    %2102 = vmatpush1.bf16.msra.mxu0 %v1598
    %2103 = vmatprep.subr.bf16.mxu0 %v1659
    %2104 = vmatpush2.bf16.msra.mxu0 %v1658
    %2105 = vmatprep.subr.bf16.mxu0 %v1655
    %2106 = vmatpush2.bf16.msra.mxu0 %v1654
    %2107 = vmatprep.subr.bf16.mxu0 %v1651
    %2108 = vmatpush2.bf16.msra.mxu0 %v1650
    %2109 = vmatprep.subr.bf16.mxu0 %v1647
    %2110 = vmatpush2.bf16.msra.mxu0 %v1646
    %2111 = vmatprep.subr.bf16.mxu0 %v1643
    %2112 = vmatpush2.bf16.msra.mxu0 %v1642
    %2113 = vmatprep.subr.bf16.mxu0 %v1639
    %2114 = vmatpush2.bf16.msra.mxu0 %v1638
    %2115 = vmatprep.subr.bf16.mxu0 %v1635
    %2116 = vmatpush2.bf16.msra.mxu0 %v1634
    %2117 = vmatprep.subr.bf16.mxu0 %v1631
    %2118 = vmatpush2.bf16.msra.mxu0 %v1630
    %2119 = vmatprep.mubr.bf16.mxu0 %v483
    %2120 = vmatmul.mubr.bf16.gmra.mxu0 %v482
    %v2121 = vpop.f32.mrf.mxu0
    %v2122 = vadd.f32 %v2081, %v2121
    %v2123 = vpop.f32.mrf.mxu0
    %v2124 = vadd.f32 %v2083, %v2123
    %v2125 = vpop.f32.mrf.mxu0
    %v2126 = vpop.f32.mrf.mxu0
    %2127 = vdwg.mxu0
    %2128 = vmatprep.subr.bf16.mxu0 %v1691
    %2129 = vmatpush1.bf16.msra.mxu0 %v1690
    %2130 = vmatprep.subr.bf16.mxu0 %v1687
    %2131 = vmatpush1.bf16.msra.mxu0 %v1686
    %2132 = vmatprep.subr.bf16.mxu0 %v1683
    %2133 = vmatpush1.bf16.msra.mxu0 %v1682
    %2134 = vmatprep.subr.bf16.mxu0 %v1679
    %2135 = vmatpush1.bf16.msra.mxu0 %v1678
    %2136 = vmatprep.subr.bf16.mxu0 %v1675
    %2137 = vmatpush1.bf16.msra.mxu0 %v1674
    %2138 = vmatprep.subr.bf16.mxu0 %v1671
    %2139 = vmatpush1.bf16.msra.mxu0 %v1670
    %2140 = vmatprep.subr.bf16.mxu0 %v1667
    %2141 = vmatpush1.bf16.msra.mxu0 %v1666
    %2142 = vmatprep.subr.bf16.mxu0 %v1663
    %2143 = vmatpush1.bf16.msra.mxu0 %v1662
    %2144 = vmatprep.subr.bf16.mxu0 %v1723
    %2145 = vmatpush2.bf16.msra.mxu0 %v1722
    %2146 = vmatprep.subr.bf16.mxu0 %v1719
    %2147 = vmatpush2.bf16.msra.mxu0 %v1718
    %2148 = vmatprep.subr.bf16.mxu0 %v1715
    %2149 = vmatpush2.bf16.msra.mxu0 %v1714
    %2150 = vmatprep.subr.bf16.mxu0 %v1711
    %2151 = vmatpush2.bf16.msra.mxu0 %v1710
    %2152 = vmatprep.subr.bf16.mxu0 %v1707
    %2153 = vmatpush2.bf16.msra.mxu0 %v1706
    %2154 = vmatprep.subr.bf16.mxu0 %v1703
    %2155 = vmatpush2.bf16.msra.mxu0 %v1702
    %2156 = vmatprep.subr.bf16.mxu0 %v1699
    %2157 = vmatpush2.bf16.msra.mxu0 %v1698
    %2158 = vmatprep.subr.bf16.mxu0 %v1695
    %2159 = vmatpush2.bf16.msra.mxu0 %v1694
    %2160 = vmatprep.mubr.bf16.mxu0 %v485
    %2161 = vmatmul.mubr.bf16.gmra.mxu0 %v484
    %v2162 = vpop.f32.mrf.mxu0
    %v2163 = vadd.f32 %v2122, %v2162
    %v2164 = vpop.f32.mrf.mxu0
    %v2165 = vadd.f32 %v2124, %v2164
    %v2166 = vpop.f32.mrf.mxu0
    %v2167 = vpop.f32.mrf.mxu0
    %2168 = vdwg.mxu0
    %2169 = vmatprep.subr.bf16.mxu0 %v1755
    %2170 = vmatpush1.bf16.msra.mxu0 %v1754
    %2171 = vmatprep.subr.bf16.mxu0 %v1751
    %2172 = vmatpush1.bf16.msra.mxu0 %v1750
    %2173 = vmatprep.subr.bf16.mxu0 %v1747
    %2174 = vmatpush1.bf16.msra.mxu0 %v1746
    %2175 = vmatprep.subr.bf16.mxu0 %v1743
    %2176 = vmatpush1.bf16.msra.mxu0 %v1742
    %2177 = vmatprep.subr.bf16.mxu0 %v1739
    %2178 = vmatpush1.bf16.msra.mxu0 %v1738
    %2179 = vmatprep.subr.bf16.mxu0 %v1735
    %2180 = vmatpush1.bf16.msra.mxu0 %v1734
    %2181 = vmatprep.subr.bf16.mxu0 %v1731
    %2182 = vmatpush1.bf16.msra.mxu0 %v1730
    %2183 = vmatprep.subr.bf16.mxu0 %v1727
    %2184 = vmatpush1.bf16.msra.mxu0 %v1726
    %2185 = vmatprep.subr.bf16.mxu0 %v1787
    %2186 = vmatpush2.bf16.msra.mxu0 %v1786
    %2187 = vmatprep.subr.bf16.mxu0 %v1783
    %2188 = vmatpush2.bf16.msra.mxu0 %v1782
    %2189 = vmatprep.subr.bf16.mxu0 %v1779
    %2190 = vmatpush2.bf16.msra.mxu0 %v1778
    %2191 = vmatprep.subr.bf16.mxu0 %v1775
    %2192 = vmatpush2.bf16.msra.mxu0 %v1774
    %2193 = vmatprep.subr.bf16.mxu0 %v1771
    %2194 = vmatpush2.bf16.msra.mxu0 %v1770
    %2195 = vmatprep.subr.bf16.mxu0 %v1767
    %2196 = vmatpush2.bf16.msra.mxu0 %v1766
    %2197 = vmatprep.subr.bf16.mxu0 %v1763
    %2198 = vmatpush2.bf16.msra.mxu0 %v1762
    %2199 = vmatprep.subr.bf16.mxu0 %v1759
    %2200 = vmatpush2.bf16.msra.mxu0 %v1758
    %2201 = vmatprep.mubr.bf16.mxu0 %v487
    %2202 = vmatmul.mubr.bf16.gmra.mxu0 %v486
    %v2203 = vpop.f32.mrf.mxu0
    %v2204 = vadd.f32 %v2163, %v2203
    %v2205 = vpop.f32.mrf.mxu0
    %v2206 = vadd.f32 %v2165, %v2205
    %v2207 = vpop.f32.mrf.mxu0
    %v2208 = vpop.f32.mrf.mxu0
    %2209 = vdwg.mxu0
    %2210 = vmatprep.subr.bf16.mxu0 %v1565
    %2211 = vmatpush1.bf16.msra.mxu0 %v1564
    %2212 = vmatprep.subr.bf16.mxu0 %v1561
    %2213 = vmatpush1.bf16.msra.mxu0 %v1560
    %2214 = vmatprep.subr.bf16.mxu0 %v1557
    %2215 = vmatpush1.bf16.msra.mxu0 %v1556
    %2216 = vmatprep.subr.bf16.mxu0 %v1553
    %2217 = vmatpush1.bf16.msra.mxu0 %v1552
    %2218 = vmatprep.subr.bf16.mxu0 %v1549
    %2219 = vmatpush1.bf16.msra.mxu0 %v1548
    %2220 = vmatprep.subr.bf16.mxu0 %v1545
    %2221 = vmatpush1.bf16.msra.mxu0 %v1544
    %2222 = vmatprep.subr.bf16.mxu0 %v1541
    %2223 = vmatpush1.bf16.msra.mxu0 %v1540
    %2224 = vmatprep.subr.bf16.mxu0 %v1537
    %2225 = vmatpush1.bf16.msra.mxu0 %v1536
    %2226 = vmatprep.subr.bf16.mxu0 %v1597
    %2227 = vmatpush2.bf16.msra.mxu0 %v1596
    %2228 = vmatprep.subr.bf16.mxu0 %v1593
    %2229 = vmatpush2.bf16.msra.mxu0 %v1592
    %2230 = vmatprep.subr.bf16.mxu0 %v1589
    %2231 = vmatpush2.bf16.msra.mxu0 %v1588
    %2232 = vmatprep.subr.bf16.mxu0 %v1585
    %2233 = vmatpush2.bf16.msra.mxu0 %v1584
    %2234 = vmatprep.subr.bf16.mxu0 %v1581
    %2235 = vmatpush2.bf16.msra.mxu0 %v1580
    %2236 = vmatprep.subr.bf16.mxu0 %v1577
    %2237 = vmatpush2.bf16.msra.mxu0 %v1576
    %2238 = vmatprep.subr.bf16.mxu0 %v1573
    %2239 = vmatpush2.bf16.msra.mxu0 %v1572
    %2240 = vmatprep.subr.bf16.mxu0 %v1569
    %2241 = vmatpush2.bf16.msra.mxu0 %v1568
    %2242 = vmatprep.mubr.bf16.mxu0 %v481
    %2243 = vmatmul.mubr.bf16.gmra.mxu0 %v480
    %v2244 = vpop.f32.mrf.mxu0
    %v2245 = vadd.f32 %v757, %v2244
    %v2246 = vpop.f32.mrf.mxu0
    %v2247 = vadd.f32 %v761, %v2246
    %v2248 = vpop.f32.mrf.mxu0
    %v2249 = vpop.f32.mrf.mxu0
    %2250 = vdwg.mxu0
    %2251 = vmatprep.subr.bf16.mxu0 %v1629
    %2252 = vmatpush1.bf16.msra.mxu0 %v1628
    %2253 = vmatprep.subr.bf16.mxu0 %v1625
    %2254 = vmatpush1.bf16.msra.mxu0 %v1624
    %2255 = vmatprep.subr.bf16.mxu0 %v1621
    %2256 = vmatpush1.bf16.msra.mxu0 %v1620
    %2257 = vmatprep.subr.bf16.mxu0 %v1617
    %2258 = vmatpush1.bf16.msra.mxu0 %v1616
    %2259 = vmatprep.subr.bf16.mxu0 %v1613
    %2260 = vmatpush1.bf16.msra.mxu0 %v1612
    %2261 = vmatprep.subr.bf16.mxu0 %v1609
    %2262 = vmatpush1.bf16.msra.mxu0 %v1608
    %2263 = vmatprep.subr.bf16.mxu0 %v1605
    %2264 = vmatpush1.bf16.msra.mxu0 %v1604
    %2265 = vmatprep.subr.bf16.mxu0 %v1601
    %2266 = vmatpush1.bf16.msra.mxu0 %v1600
    %2267 = vmatprep.subr.bf16.mxu0 %v1661
    %2268 = vmatpush2.bf16.msra.mxu0 %v1660
    %2269 = vmatprep.subr.bf16.mxu0 %v1657
    %2270 = vmatpush2.bf16.msra.mxu0 %v1656
    %2271 = vmatprep.subr.bf16.mxu0 %v1653
    %2272 = vmatpush2.bf16.msra.mxu0 %v1652
    %2273 = vmatprep.subr.bf16.mxu0 %v1649
    %2274 = vmatpush2.bf16.msra.mxu0 %v1648
    %2275 = vmatprep.subr.bf16.mxu0 %v1645
    %2276 = vmatpush2.bf16.msra.mxu0 %v1644
    %2277 = vmatprep.subr.bf16.mxu0 %v1641
    %2278 = vmatpush2.bf16.msra.mxu0 %v1640
    %2279 = vmatprep.subr.bf16.mxu0 %v1637
    %2280 = vmatpush2.bf16.msra.mxu0 %v1636
    %2281 = vmatprep.subr.bf16.mxu0 %v1633
    %2282 = vmatpush2.bf16.msra.mxu0 %v1632
    %2283 = vmatprep.mubr.bf16.mxu0 %v483
    %2284 = vmatmul.mubr.bf16.gmra.mxu0 %v482
    %v2285 = vpop.f32.mrf.mxu0
    %v2286 = vadd.f32 %v2245, %v2285
    %v2287 = vpop.f32.mrf.mxu0
    %v2288 = vadd.f32 %v2247, %v2287
    %v2289 = vpop.f32.mrf.mxu0
    %v2290 = vpop.f32.mrf.mxu0
    %2291 = vdwg.mxu0
    %2292 = vmatprep.subr.bf16.mxu0 %v1693
    %2293 = vmatpush1.bf16.msra.mxu0 %v1692
    %2294 = vmatprep.subr.bf16.mxu0 %v1689
    %2295 = vmatpush1.bf16.msra.mxu0 %v1688
    %2296 = vmatprep.subr.bf16.mxu0 %v1685
    %2297 = vmatpush1.bf16.msra.mxu0 %v1684
    %2298 = vmatprep.subr.bf16.mxu0 %v1681
    %2299 = vmatpush1.bf16.msra.mxu0 %v1680
    %2300 = vmatprep.subr.bf16.mxu0 %v1677
    %2301 = vmatpush1.bf16.msra.mxu0 %v1676
    %2302 = vmatprep.subr.bf16.mxu0 %v1673
    %2303 = vmatpush1.bf16.msra.mxu0 %v1672
    %2304 = vmatprep.subr.bf16.mxu0 %v1669
    %2305 = vmatpush1.bf16.msra.mxu0 %v1668
    %2306 = vmatprep.subr.bf16.mxu0 %v1665
    %2307 = vmatpush1.bf16.msra.mxu0 %v1664
    %2308 = vmatprep.subr.bf16.mxu0 %v1725
    %2309 = vmatpush2.bf16.msra.mxu0 %v1724
    %2310 = vmatprep.subr.bf16.mxu0 %v1721
    %2311 = vmatpush2.bf16.msra.mxu0 %v1720
    %2312 = vmatprep.subr.bf16.mxu0 %v1717
    %2313 = vmatpush2.bf16.msra.mxu0 %v1716
    %2314 = vmatprep.subr.bf16.mxu0 %v1713
    %2315 = vmatpush2.bf16.msra.mxu0 %v1712
    %2316 = vmatprep.subr.bf16.mxu0 %v1709
    %2317 = vmatpush2.bf16.msra.mxu0 %v1708
    %2318 = vmatprep.subr.bf16.mxu0 %v1705
    %2319 = vmatpush2.bf16.msra.mxu0 %v1704
    %2320 = vmatprep.subr.bf16.mxu0 %v1701
    %2321 = vmatpush2.bf16.msra.mxu0 %v1700
    %2322 = vmatprep.subr.bf16.mxu0 %v1697
    %2323 = vmatpush2.bf16.msra.mxu0 %v1696
    %2324 = vmatprep.mubr.bf16.mxu0 %v485
    %2325 = vmatmul.mubr.bf16.gmra.mxu0 %v484
    %v2326 = vpop.f32.mrf.mxu0
    %v2327 = vadd.f32 %v2286, %v2326
    %v2328 = vpop.f32.mrf.mxu0
    %v2329 = vadd.f32 %v2288, %v2328
    %v2330 = vpop.f32.mrf.mxu0
    %v2331 = vpop.f32.mrf.mxu0
    %2332 = vdwg.mxu0
    %2333 = vmatprep.subr.bf16.mxu0 %v1757
    %2334 = vmatpush1.bf16.msra.mxu0 %v1756
    %2335 = vmatprep.subr.bf16.mxu0 %v1753
    %2336 = vmatpush1.bf16.msra.mxu0 %v1752
    %2337 = vmatprep.subr.bf16.mxu0 %v1749
    %2338 = vmatpush1.bf16.msra.mxu0 %v1748
    %2339 = vmatprep.subr.bf16.mxu0 %v1745
    %2340 = vmatpush1.bf16.msra.mxu0 %v1744
    %2341 = vmatprep.subr.bf16.mxu0 %v1741
    %2342 = vmatpush1.bf16.msra.mxu0 %v1740
    %2343 = vmatprep.subr.bf16.mxu0 %v1737
    %2344 = vmatpush1.bf16.msra.mxu0 %v1736
    %2345 = vmatprep.subr.bf16.mxu0 %v1733
    %2346 = vmatpush1.bf16.msra.mxu0 %v1732
    %2347 = vmatprep.subr.bf16.mxu0 %v1729
    %2348 = vmatpush1.bf16.msra.mxu0 %v1728
    %2349 = vmatprep.subr.bf16.mxu0 %v1789
    %2350 = vmatpush2.bf16.msra.mxu0 %v1788
    %2351 = vmatprep.subr.bf16.mxu0 %v1785
    %2352 = vmatpush2.bf16.msra.mxu0 %v1784
    %2353 = vmatprep.subr.bf16.mxu0 %v1781
    %2354 = vmatpush2.bf16.msra.mxu0 %v1780
    %2355 = vmatprep.subr.bf16.mxu0 %v1777
    %2356 = vmatpush2.bf16.msra.mxu0 %v1776
    %2357 = vmatprep.subr.bf16.mxu0 %v1773
    %2358 = vmatpush2.bf16.msra.mxu0 %v1772
    %2359 = vmatprep.subr.bf16.mxu0 %v1769
    %2360 = vmatpush2.bf16.msra.mxu0 %v1768
    %2361 = vmatprep.subr.bf16.mxu0 %v1765
    %2362 = vmatpush2.bf16.msra.mxu0 %v1764
    %2363 = vmatprep.subr.bf16.mxu0 %v1761
    %2364 = vmatpush2.bf16.msra.mxu0 %v1760
    %2365 = vmatprep.mubr.bf16.mxu0 %v487
    %2366 = vmatmul.mubr.bf16.gmra.mxu0 %v486
    %v2367 = vpop.f32.mrf.mxu0
    %v2368 = vadd.f32 %v2327, %v2367
    %v2369 = vpop.f32.mrf.mxu0
    %v2370 = vadd.f32 %v2329, %v2369
    %v2371 = vpop.f32.mrf.mxu0
    %v2372 = vpop.f32.mrf.mxu0
    %2373 = vdwg.mxu0
    %vm2374 = vcmp.gt.f32.partialorder %v2204, 0.0
    %vm2375 = vcmp.gt.f32.partialorder %v2206, 0.0
    %vm2376 = vcmp.gt.f32.partialorder %v2368, 0.0
    %vm2377 = vcmp.gt.f32.partialorder %v2370, 0.0
    %v2378 = vmul.f32 %v2204, 0.01
    %v2379 = vmul.f32 %v2206, 0.01
    %v2380 = vmul.f32 %v2368, 0.01
    %v2381 = vmul.f32 %v2370, 0.01
    %v2382 = vsel %vm2374, %v2204, %v2378
    %v2383 = vsel %vm2375, %v2206, %v2379
    %v2384 = vsel %vm2376, %v2368, %v2380
    %v2385 = vsel %vm2377, %v2370, %v2381
    %v2386 = vpack.c.bf16 %v2382, %v2382
    %v2387 = vpack.c.bf16 %v2383, %v2383
    %v2388 = vpack.c.bf16 %v2384, %v2384
    %v2389 = vpack.c.bf16 %v2385, %v2385
    %v2390 = vld [vmem:[#allocation11] sm:$0xff]
    %v2391 = vld [vmem:[#allocation11 + $0x8] sm:$0xff]
    %v2392 = vld [vmem:[#allocation11 + $0x10] sm:$0xff]
    %v2393 = vld [vmem:[#allocation11 + $0x18] sm:$0xff]
    %v2394 = vld [vmem:[#allocation11 + $0x20] sm:$0xff]
    %v2395 = vld [vmem:[#allocation11 + $0x28] sm:$0xff]
    %v2396 = vld [vmem:[#allocation11 + $0x30] sm:$0xff]
    %v2397 = vld [vmem:[#allocation11 + $0x38] sm:$0xff]
    %v2398 = vld [vmem:[#allocation11 + $0x40] sm:$0xff]
    %v2399 = vld [vmem:[#allocation11 + $0x48] sm:$0xff]
    %v2400 = vld [vmem:[#allocation11 + $0x50] sm:$0xff]
    %v2401 = vld [vmem:[#allocation11 + $0x58] sm:$0xff]
    %v2402 = vld [vmem:[#allocation11 + $0x60] sm:$0xff]
    %v2403 = vld [vmem:[#allocation11 + $0x68] sm:$0xff]
    %v2404 = vld [vmem:[#allocation11 + $0x70] sm:$0xff]
    %v2405 = vld [vmem:[#allocation11 + $0x78] sm:$0xff]
    %v2406 = vld [vmem:[#allocation11 + $0x80] sm:$0xff]
    %v2407 = vld [vmem:[#allocation11 + $0x88] sm:$0xff]
    %v2408 = vld [vmem:[#allocation11 + $0x90] sm:$0xff]
    %v2409 = vld [vmem:[#allocation11 + $0x98] sm:$0xff]
    %v2410 = vld [vmem:[#allocation11 + $0xa0] sm:$0xff]
    %v2411 = vld [vmem:[#allocation11 + $0xa8] sm:$0xff]
    %v2412 = vld [vmem:[#allocation11 + $0xb0] sm:$0xff]
    %v2413 = vld [vmem:[#allocation11 + $0xb8] sm:$0xff]
    %v2414 = vld [vmem:[#allocation11 + $0xc0] sm:$0xff]
    %v2415 = vld [vmem:[#allocation11 + $0xc8] sm:$0xff]
    %v2416 = vld [vmem:[#allocation11 + $0xd0] sm:$0xff]
    %v2417 = vld [vmem:[#allocation11 + $0xd8] sm:$0xff]
    %v2418 = vld [vmem:[#allocation11 + $0xe0] sm:$0xff]
    %v2419 = vld [vmem:[#allocation11 + $0xe8] sm:$0xff]
    %v2420 = vld [vmem:[#allocation11 + $0xf0] sm:$0xff]
    %v2421 = vld [vmem:[#allocation11 + $0xf8] sm:$0xff]
    %v2422 = vld [vmem:[#allocation11 + $0x100] sm:$0xff]
    %v2423 = vld [vmem:[#allocation11 + $0x108] sm:$0xff]
    %v2424 = vld [vmem:[#allocation11 + $0x110] sm:$0xff]
    %v2425 = vld [vmem:[#allocation11 + $0x118] sm:$0xff]
    %v2426 = vld [vmem:[#allocation11 + $0x120] sm:$0xff]
    %v2427 = vld [vmem:[#allocation11 + $0x128] sm:$0xff]
    %v2428 = vld [vmem:[#allocation11 + $0x130] sm:$0xff]
    %v2429 = vld [vmem:[#allocation11 + $0x138] sm:$0xff]
    %v2430 = vld [vmem:[#allocation11 + $0x140] sm:$0xff]
    %v2431 = vld [vmem:[#allocation11 + $0x148] sm:$0xff]
    %v2432 = vld [vmem:[#allocation11 + $0x150] sm:$0xff]
    %v2433 = vld [vmem:[#allocation11 + $0x158] sm:$0xff]
    %v2434 = vld [vmem:[#allocation11 + $0x160] sm:$0xff]
    %v2435 = vld [vmem:[#allocation11 + $0x168] sm:$0xff]
    %v2436 = vld [vmem:[#allocation11 + $0x170] sm:$0xff]
    %v2437 = vld [vmem:[#allocation11 + $0x178] sm:$0xff]
    %v2438 = vld [vmem:[#allocation11 + $0x180] sm:$0xff]
    %v2439 = vld [vmem:[#allocation11 + $0x188] sm:$0xff]
    %v2440 = vld [vmem:[#allocation11 + $0x190] sm:$0xff]
    %v2441 = vld [vmem:[#allocation11 + $0x198] sm:$0xff]
    %v2442 = vld [vmem:[#allocation11 + $0x1a0] sm:$0xff]
    %v2443 = vld [vmem:[#allocation11 + $0x1a8] sm:$0xff]
    %v2444 = vld [vmem:[#allocation11 + $0x1b0] sm:$0xff]
    %v2445 = vld [vmem:[#allocation11 + $0x1b8] sm:$0xff]
    %v2446 = vld [vmem:[#allocation11 + $0x1c0] sm:$0xff]
    %v2447 = vld [vmem:[#allocation11 + $0x1c8] sm:$0xff]
    %v2448 = vld [vmem:[#allocation11 + $0x1d0] sm:$0xff]
    %v2449 = vld [vmem:[#allocation11 + $0x1d8] sm:$0xff]
    %v2450 = vld [vmem:[#allocation11 + $0x1e0] sm:$0xff]
    %v2451 = vld [vmem:[#allocation11 + $0x1e8] sm:$0xff]
    %v2452 = vld [vmem:[#allocation11 + $0x1f0] sm:$0xff]
    %v2453 = vld [vmem:[#allocation11 + $0x1f8] sm:$0xff]
    %v2454 = vld [vmem:[%s6] sm:$0x3]
    %v2456 = vlaneseq
    %v2457 = vshrl.u32 %v2456, 7
    %v2458 = vsub.s32 0, %v2457
    %v2459 = vrot.slane %v2454, %v2458
    %v2460 = vlaneseq
    %v2461 = vshrl.u32 %v2460, 7
    %v2462 = vsub.s32 1, %v2461
    %v2463 = vrot.slane %v2454, %v2462
    %v2530 = vunpack.c.l.b16 %v2390
    %v2531 = vunpack.c.h.b16 %v2390
    %v2532 = vunpack.c.l.b16 %v2391
    %v2533 = vunpack.c.h.b16 %v2391
    %v2534 = vunpack.c.l.b16 %v2392
    %v2535 = vunpack.c.h.b16 %v2392
    %v2536 = vunpack.c.l.b16 %v2393
    %v2537 = vunpack.c.h.b16 %v2393
    %v2538 = vunpack.c.l.b16 %v2394
    %v2539 = vunpack.c.h.b16 %v2394
    %v2540 = vunpack.c.l.b16 %v2395
    %v2541 = vunpack.c.h.b16 %v2395
    %v2542 = vunpack.c.l.b16 %v2396
    %v2543 = vunpack.c.h.b16 %v2396
    %v2544 = vunpack.c.l.b16 %v2397
    %v2545 = vunpack.c.h.b16 %v2397
    %v2546 = vunpack.c.l.b16 %v2398
    %v2547 = vunpack.c.h.b16 %v2398
    %v2548 = vunpack.c.l.b16 %v2399
    %v2549 = vunpack.c.h.b16 %v2399
    %v2550 = vunpack.c.l.b16 %v2400
    %v2551 = vunpack.c.h.b16 %v2400
    %v2552 = vunpack.c.l.b16 %v2401
    %v2553 = vunpack.c.h.b16 %v2401
    %v2554 = vunpack.c.l.b16 %v2402
    %v2555 = vunpack.c.h.b16 %v2402
    %v2556 = vunpack.c.l.b16 %v2403
    %v2557 = vunpack.c.h.b16 %v2403
    %v2558 = vunpack.c.l.b16 %v2404
    %v2559 = vunpack.c.h.b16 %v2404
    %v2560 = vunpack.c.l.b16 %v2405
    %v2561 = vunpack.c.h.b16 %v2405
    %v2562 = vunpack.c.l.b16 %v2406
    %v2563 = vunpack.c.h.b16 %v2406
    %v2564 = vunpack.c.l.b16 %v2407
    %v2565 = vunpack.c.h.b16 %v2407
    %v2566 = vunpack.c.l.b16 %v2408
    %v2567 = vunpack.c.h.b16 %v2408
    %v2568 = vunpack.c.l.b16 %v2409
    %v2569 = vunpack.c.h.b16 %v2409
    %v2570 = vunpack.c.l.b16 %v2410
    %v2571 = vunpack.c.h.b16 %v2410
    %v2572 = vunpack.c.l.b16 %v2411
    %v2573 = vunpack.c.h.b16 %v2411
    %v2574 = vunpack.c.l.b16 %v2412
    %v2575 = vunpack.c.h.b16 %v2412
    %v2576 = vunpack.c.l.b16 %v2413
    %v2577 = vunpack.c.h.b16 %v2413
    %v2578 = vunpack.c.l.b16 %v2414
    %v2579 = vunpack.c.h.b16 %v2414
    %v2580 = vunpack.c.l.b16 %v2415
    %v2581 = vunpack.c.h.b16 %v2415
    %v2582 = vunpack.c.l.b16 %v2416
    %v2583 = vunpack.c.h.b16 %v2416
    %v2584 = vunpack.c.l.b16 %v2417
    %v2585 = vunpack.c.h.b16 %v2417
    %v2586 = vunpack.c.l.b16 %v2418
    %v2587 = vunpack.c.h.b16 %v2418
    %v2588 = vunpack.c.l.b16 %v2419
    %v2589 = vunpack.c.h.b16 %v2419
    %v2590 = vunpack.c.l.b16 %v2420
    %v2591 = vunpack.c.h.b16 %v2420
    %v2592 = vunpack.c.l.b16 %v2421
    %v2593 = vunpack.c.h.b16 %v2421
    %v2594 = vunpack.c.l.b16 %v2422
    %v2595 = vunpack.c.h.b16 %v2422
    %v2596 = vunpack.c.l.b16 %v2423
    %v2597 = vunpack.c.h.b16 %v2423
    %v2598 = vunpack.c.l.b16 %v2424
    %v2599 = vunpack.c.h.b16 %v2424
    %v2600 = vunpack.c.l.b16 %v2425
    %v2601 = vunpack.c.h.b16 %v2425
    %v2602 = vunpack.c.l.b16 %v2426
    %v2603 = vunpack.c.h.b16 %v2426
    %v2604 = vunpack.c.l.b16 %v2427
    %v2605 = vunpack.c.h.b16 %v2427
    %v2606 = vunpack.c.l.b16 %v2428
    %v2607 = vunpack.c.h.b16 %v2428
    %v2608 = vunpack.c.l.b16 %v2429
    %v2609 = vunpack.c.h.b16 %v2429
    %v2610 = vunpack.c.l.b16 %v2430
    %v2611 = vunpack.c.h.b16 %v2430
    %v2612 = vunpack.c.l.b16 %v2431
    %v2613 = vunpack.c.h.b16 %v2431
    %v2614 = vunpack.c.l.b16 %v2432
    %v2615 = vunpack.c.h.b16 %v2432
    %v2616 = vunpack.c.l.b16 %v2433
    %v2617 = vunpack.c.h.b16 %v2433
    %v2618 = vunpack.c.l.b16 %v2434
    %v2619 = vunpack.c.h.b16 %v2434
    %v2620 = vunpack.c.l.b16 %v2435
    %v2621 = vunpack.c.h.b16 %v2435
    %v2622 = vunpack.c.l.b16 %v2436
    %v2623 = vunpack.c.h.b16 %v2436
    %v2624 = vunpack.c.l.b16 %v2437
    %v2625 = vunpack.c.h.b16 %v2437
    %v2626 = vunpack.c.l.b16 %v2438
    %v2627 = vunpack.c.h.b16 %v2438
    %v2628 = vunpack.c.l.b16 %v2439
    %v2629 = vunpack.c.h.b16 %v2439
    %v2630 = vunpack.c.l.b16 %v2440
    %v2631 = vunpack.c.h.b16 %v2440
    %v2632 = vunpack.c.l.b16 %v2441
    %v2633 = vunpack.c.h.b16 %v2441
    %v2634 = vunpack.c.l.b16 %v2442
    %v2635 = vunpack.c.h.b16 %v2442
    %v2636 = vunpack.c.l.b16 %v2443
    %v2637 = vunpack.c.h.b16 %v2443
    %v2638 = vunpack.c.l.b16 %v2444
    %v2639 = vunpack.c.h.b16 %v2444
    %v2640 = vunpack.c.l.b16 %v2445
    %v2641 = vunpack.c.h.b16 %v2445
    %v2642 = vunpack.c.l.b16 %v2446
    %v2643 = vunpack.c.h.b16 %v2446
    %v2644 = vunpack.c.l.b16 %v2447
    %v2645 = vunpack.c.h.b16 %v2447
    %v2646 = vunpack.c.l.b16 %v2448
    %v2647 = vunpack.c.h.b16 %v2448
    %v2648 = vunpack.c.l.b16 %v2449
    %v2649 = vunpack.c.h.b16 %v2449
    %v2650 = vunpack.c.l.b16 %v2450
    %v2651 = vunpack.c.h.b16 %v2450
    %v2652 = vunpack.c.l.b16 %v2451
    %v2653 = vunpack.c.h.b16 %v2451
    %v2654 = vunpack.c.l.b16 %v2452
    %v2655 = vunpack.c.h.b16 %v2452
    %v2656 = vunpack.c.l.b16 %v2453
    %v2657 = vunpack.c.h.b16 %v2453
    %v2658 = vpack.c.b16 %v2532, %v2530
    %v2659 = vpack.c.b16 %v2533, %v2531
    %v2660 = vpack.c.b16 %v2536, %v2534
    %v2661 = vpack.c.b16 %v2537, %v2535
    %v2662 = vpack.c.b16 %v2540, %v2538
    %v2663 = vpack.c.b16 %v2541, %v2539
    %v2664 = vpack.c.b16 %v2544, %v2542
    %v2665 = vpack.c.b16 %v2545, %v2543
    %v2666 = vpack.c.b16 %v2548, %v2546
    %v2667 = vpack.c.b16 %v2549, %v2547
    %v2668 = vpack.c.b16 %v2552, %v2550
    %v2669 = vpack.c.b16 %v2553, %v2551
    %v2670 = vpack.c.b16 %v2556, %v2554
    %v2671 = vpack.c.b16 %v2557, %v2555
    %v2672 = vpack.c.b16 %v2560, %v2558
    %v2673 = vpack.c.b16 %v2561, %v2559
    %v2674 = vpack.c.b16 %v2564, %v2562
    %v2675 = vpack.c.b16 %v2565, %v2563
    %v2676 = vpack.c.b16 %v2568, %v2566
    %v2677 = vpack.c.b16 %v2569, %v2567
    %v2678 = vpack.c.b16 %v2572, %v2570
    %v2679 = vpack.c.b16 %v2573, %v2571
    %v2680 = vpack.c.b16 %v2576, %v2574
    %v2681 = vpack.c.b16 %v2577, %v2575
    %v2682 = vpack.c.b16 %v2580, %v2578
    %v2683 = vpack.c.b16 %v2581, %v2579
    %v2684 = vpack.c.b16 %v2584, %v2582
    %v2685 = vpack.c.b16 %v2585, %v2583
    %v2686 = vpack.c.b16 %v2588, %v2586
    %v2687 = vpack.c.b16 %v2589, %v2587
    %v2688 = vpack.c.b16 %v2592, %v2590
    %v2689 = vpack.c.b16 %v2593, %v2591
    %v2690 = vpack.c.b16 %v2596, %v2594
    %v2691 = vpack.c.b16 %v2597, %v2595
    %v2692 = vpack.c.b16 %v2600, %v2598
    %v2693 = vpack.c.b16 %v2601, %v2599
    %v2694 = vpack.c.b16 %v2604, %v2602
    %v2695 = vpack.c.b16 %v2605, %v2603
    %v2696 = vpack.c.b16 %v2608, %v2606
    %v2697 = vpack.c.b16 %v2609, %v2607
    %v2698 = vpack.c.b16 %v2612, %v2610
    %v2699 = vpack.c.b16 %v2613, %v2611
    %v2700 = vpack.c.b16 %v2616, %v2614
    %v2701 = vpack.c.b16 %v2617, %v2615
    %v2702 = vpack.c.b16 %v2620, %v2618
    %v2703 = vpack.c.b16 %v2621, %v2619
    %v2704 = vpack.c.b16 %v2624, %v2622
    %v2705 = vpack.c.b16 %v2625, %v2623
    %v2706 = vpack.c.b16 %v2628, %v2626
    %v2707 = vpack.c.b16 %v2629, %v2627
    %v2708 = vpack.c.b16 %v2632, %v2630
    %v2709 = vpack.c.b16 %v2633, %v2631
    %v2710 = vpack.c.b16 %v2636, %v2634
    %v2711 = vpack.c.b16 %v2637, %v2635
    %v2712 = vpack.c.b16 %v2640, %v2638
    %v2713 = vpack.c.b16 %v2641, %v2639
    %v2714 = vpack.c.b16 %v2644, %v2642
    %v2715 = vpack.c.b16 %v2645, %v2643
    %v2716 = vpack.c.b16 %v2648, %v2646
    %v2717 = vpack.c.b16 %v2649, %v2647
    %v2718 = vpack.c.b16 %v2652, %v2650
    %v2719 = vpack.c.b16 %v2653, %v2651
    %v2720 = vpack.c.b16 %v2656, %v2654
    %v2721 = vpack.c.b16 %v2657, %v2655
    %2786 = vmatprep.subr.bf16.mxu0 %v2673
    %2787 = vmatpush1.bf16.msra.mxu0 %v2672
    %2788 = vmatprep.subr.bf16.mxu0 %v2671
    %2789 = vmatpush1.bf16.msra.mxu0 %v2670
    %2790 = vmatprep.subr.bf16.mxu0 %v2669
    %2791 = vmatpush1.bf16.msra.mxu0 %v2668
    %2792 = vmatprep.subr.bf16.mxu0 %v2667
    %2793 = vmatpush1.bf16.msra.mxu0 %v2666
    %2794 = vmatprep.subr.bf16.mxu0 %v2665
    %2795 = vmatpush1.bf16.msra.mxu0 %v2664
    %2796 = vmatprep.subr.bf16.mxu0 %v2663
    %2797 = vmatpush1.bf16.msra.mxu0 %v2662
    %2798 = vmatprep.subr.bf16.mxu0 %v2661
    %2799 = vmatpush1.bf16.msra.mxu0 %v2660
    %2800 = vmatprep.subr.bf16.mxu0 %v2659
    %2801 = vmatpush1.bf16.msra.mxu0 %v2658
    %2802 = vmatprep.subr.bf16.mxu0 %v2689
    %2803 = vmatpush2.bf16.msra.mxu0 %v2688
    %2804 = vmatprep.subr.bf16.mxu0 %v2687
    %2805 = vmatpush2.bf16.msra.mxu0 %v2686
    %2806 = vmatprep.subr.bf16.mxu0 %v2685
    %2807 = vmatpush2.bf16.msra.mxu0 %v2684
    %2808 = vmatprep.subr.bf16.mxu0 %v2683
    %2809 = vmatpush2.bf16.msra.mxu0 %v2682
    %2810 = vmatprep.subr.bf16.mxu0 %v2681
    %2811 = vmatpush2.bf16.msra.mxu0 %v2680
    %2812 = vmatprep.subr.bf16.mxu0 %v2679
    %2813 = vmatpush2.bf16.msra.mxu0 %v2678
    %2814 = vmatprep.subr.bf16.mxu0 %v2677
    %2815 = vmatpush2.bf16.msra.mxu0 %v2676
    %2816 = vmatprep.subr.bf16.mxu0 %v2675
    %2817 = vmatpush2.bf16.msra.mxu0 %v2674
    %2818 = vmatprep.mubr.bf16.mxu0 %v2387
    %2819 = vmatmul.mubr.bf16.gmra.mxu0 %v2386
    %v2820 = vpop.f32.mrf.mxu0
    %v2821 = vadd.f32 %v2459, %v2820
    %v2822 = vpop.f32.mrf.mxu0
    %v2823 = vadd.f32 %v2463, %v2822
    %v2824 = vpop.f32.mrf.mxu0
    %v2825 = vpop.f32.mrf.mxu0
    %2826 = vdwg.mxu0
    %2827 = vmatprep.subr.bf16.mxu0 %v2705
    %2828 = vmatpush1.bf16.msra.mxu0 %v2704
    %2829 = vmatprep.subr.bf16.mxu0 %v2703
    %2830 = vmatpush1.bf16.msra.mxu0 %v2702
    %2831 = vmatprep.subr.bf16.mxu0 %v2701
    %2832 = vmatpush1.bf16.msra.mxu0 %v2700
    %2833 = vmatprep.subr.bf16.mxu0 %v2699
    %2834 = vmatpush1.bf16.msra.mxu0 %v2698
    %2835 = vmatprep.subr.bf16.mxu0 %v2697
    %2836 = vmatpush1.bf16.msra.mxu0 %v2696
    %2837 = vmatprep.subr.bf16.mxu0 %v2695
    %2838 = vmatpush1.bf16.msra.mxu0 %v2694
    %2839 = vmatprep.subr.bf16.mxu0 %v2693
    %2840 = vmatpush1.bf16.msra.mxu0 %v2692
    %2841 = vmatprep.subr.bf16.mxu0 %v2691
    %2842 = vmatpush1.bf16.msra.mxu0 %v2690
    %2843 = vmatprep.subr.bf16.mxu0 %v2721
    %2844 = vmatpush2.bf16.msra.mxu0 %v2720
    %2845 = vmatprep.subr.bf16.mxu0 %v2719
    %2846 = vmatpush2.bf16.msra.mxu0 %v2718
    %2847 = vmatprep.subr.bf16.mxu0 %v2717
    %2848 = vmatpush2.bf16.msra.mxu0 %v2716
    %2849 = vmatprep.subr.bf16.mxu0 %v2715
    %2850 = vmatpush2.bf16.msra.mxu0 %v2714
    %2851 = vmatprep.subr.bf16.mxu0 %v2713
    %2852 = vmatpush2.bf16.msra.mxu0 %v2712
    %2853 = vmatprep.subr.bf16.mxu0 %v2711
    %2854 = vmatpush2.bf16.msra.mxu0 %v2710
    %2855 = vmatprep.subr.bf16.mxu0 %v2709
    %2856 = vmatpush2.bf16.msra.mxu0 %v2708
    %2857 = vmatprep.subr.bf16.mxu0 %v2707
    %2858 = vmatpush2.bf16.msra.mxu0 %v2706
    %2859 = vmatprep.mubr.bf16.mxu0 %v2389
    %2860 = vmatmul.mubr.bf16.gmra.mxu0 %v2388
    %v2861 = vpop.f32.mrf.mxu0
    %v2862 = vadd.f32 %v2821, %v2861
    %v2863 = vpop.f32.mrf.mxu0
    %v2864 = vadd.f32 %v2823, %v2863
    %v2865 = vpop.f32.mrf.mxu0
    %v2866 = vpop.f32.mrf.mxu0
    %2867 = vdwg.mxu0
    %vm2868 = vcmp.gt.f32.partialorder %v2862, 0.0
    %vm2869 = vcmp.gt.f32.partialorder %v2864, 0.0
    %v2870 = vmul.f32 %v2862, 0.01
    %v2871 = vmul.f32 %v2864, 0.01
    %v2872 = vsel %vm2868, %v2862, %v2870
    %v2873 = vsel %vm2869, %v2864, %v2871
    %v2874 = vpack.c.bf16 %v2872, %v2872
    %v2875 = vpack.c.bf16 %v2873, %v2873
    %v2876 = vld [vmem:[%s7] sm:$0x3]
    %v2877 = vld [vmem:[#allocation2] sm:$0x1]
    %2879 = vset.pattern.permute.xlu0 0
    %2880 = vperm.xlu0 %2879, %v2877
    %v2881 = vpop.permute.xlu0 %2880
    %v2883 = vlaneseq
    %v2884 = vshrl.u32 %v2883, 7
    %v2885 = vsub.s32 0, %v2884
    %v2886 = vrot.slane %v2881, %v2885
    %v2889 = vunpack.c.l.s4 1966171168
    %v2890 = vunpack.c.0.s8 %v2889
    %v2891 = vlaneseq
    %v2892 = vshrl.u32 %v2891, 7
    %v2893 = vsub.s32 %v2890, %v2892
    %v2894 = vrot.slane %v2876, %v2893
    %v2895 = vcombine.high %v2894, %v2894
    %v2897 = vunpack.c.l.s4 1966171168
    %v2898 = vunpack.c.0.s8 %v2897
    %v2899 = vlaneseq
    %v2900 = vshrl.u32 %v2899, 7
    %v2901 = vsub.s32 %v2898, %v2900
    %v2902 = vrot.slane %v2894, %v2901
    %v2904 = vunpack.c.l.s4 1966171168
    %v2905 = vunpack.c.0.s8 %v2904
    %v2906 = vlaneseq
    %v2907 = vshrl.u32 %v2906, 7
    %v2908 = vsub.s32 %v2905, %v2907
    %v2909 = vrot.slane %v2895, %v2908
    %2912 = vmatprep.subr.bf16.mxu0 0
    %2913 = vmatpush1.bf16.xpose.msra.mxu0 0
    %2914 = vmatprep.subr.bf16.mxu0 0
    %2915 = vmatpush1.bf16.xpose.msra.mxu0 0
    %2916 = vmatprep.subr.bf16.mxu0 0
    %2917 = vmatpush1.bf16.xpose.msra.mxu0 0
    %2918 = vmatprep.subr.bf16.mxu0 0
    %2919 = vmatpush1.bf16.xpose.msra.mxu0 0
    %2920 = vmatprep.subr.bf16.mxu0 0
    %2921 = vmatpush1.bf16.xpose.msra.mxu0 0
    %2922 = vmatprep.subr.bf16.mxu0 0
    %2923 = vmatpush1.bf16.xpose.msra.mxu0 0
    %2924 = vmatprep.subr.bf16.mxu0 0
    %2925 = vmatpush1.bf16.xpose.msra.mxu0 0
    %2926 = vmatprep.subr.bf16.mxu0 %v2875
    %2927 = vmatpush1.bf16.xpose.msra.mxu0 %v2874
    %2928 = vmatprep.subr.bf16.mxu0 0
    %2929 = vmatpush2.bf16.xpose.msra.mxu0 0
    %2930 = vmatprep.subr.bf16.mxu0 0
    %2931 = vmatpush2.bf16.xpose.msra.mxu0 0
    %2932 = vmatprep.subr.bf16.mxu0 0
    %2933 = vmatpush2.bf16.xpose.msra.mxu0 0
    %2934 = vmatprep.subr.bf16.mxu0 0
    %2935 = vmatpush2.bf16.xpose.msra.mxu0 0
    %2936 = vmatprep.subr.bf16.mxu0 0
    %2937 = vmatpush2.bf16.xpose.msra.mxu0 0
    %2938 = vmatprep.subr.bf16.mxu0 0
    %2939 = vmatpush2.bf16.xpose.msra.mxu0 0
    %2940 = vmatprep.subr.bf16.mxu0 0
    %2941 = vmatpush2.bf16.xpose.msra.mxu0 0
    %2942 = vmatprep.subr.bf16.mxu0 0
    %2943 = vmatpush2.bf16.xpose.msra.mxu0 0
    %2944 = vmatprep.mubr.bf16.mxu0 %v2909
    %2945 = vmatmul.mubr.bf16.gmra.mxu0 %v2902
    %v2946 = vpop.f32.mrf.mxu0
    %v2947 = vadd.f32 %v2886, %v2946
    %v2948 = vpop.f32.mrf.mxu0
    %v2949 = vpop.f32.mrf.mxu0
    %v2950 = vpop.f32.mrf.mxu0
    %2951 = vdwg.mxu0
    %v2952 = vxor.u32 %v2947, 2147483648
    %v2953 = vmul.f32 %v2952, 1.442695
    %v2954 = vpow.pop %v2953
    %v2955 = vadd.f32 %v2954, 1.0
    %v2956 = vrcp.pop %v2955
    %v2957 = vmul.f32 1.0, %v2956
    %vm2958 = vcmask 57344
    %2959 = vst.msk [vmem:[#allocation12] sm:$0x1] %vm2958, %v2957
    // Predicated region
    $region58: #{tpu_custom_call.1} parent=1 // pred_check
      _
    $region59: #{tpu_custom_call.1} parent=1 // pred_check_branch
      %2961 = sbr.rel (0) target = $region61
    $region60: #{tpu_custom_call.1} parent=1 // pred_region
      %s2963 = ssub.s32 16, 16
      %2964 = vsyncadd [#allocation5], %s2963
      %s2966 = sshll.u32 [#allocation12], 4
      %s2967 = int_to_ptr.vmem [resolvable:$true] %s2966
      %2969 = dma.vmem_to_hbm [thread:$0]  %s2967, 16, %s9, [#allocation5]
    $region61: #{tpu_custom_call.1} parent=1 // pred_fallthru
      _
    // Predicated region
    $region62: #{tpu_custom_call.1} parent=1 // pred_check
      _
    $region63: #{tpu_custom_call.1} parent=1 // pred_check_branch
      %2971 = sbr.rel (0) target = $region65
    $region64: #{tpu_custom_call.1} parent=1 // pred_region
      %2972 = dma.done [#allocation5], 16
    $region65: #{tpu_custom_call.1} parent=1 // pred_fallthru
      _
    %2973 = vsyncpa [#allocation4], 1
    %2974 = vsyncpa [#allocation7], 1
    %2975 = vsyncpa [#allocation10], 1
    %2976 = vsyncpa [#allocation5], 1

</llo_original>
